<compile_context>
chip_gen: v7x
topology: tpu7x:2x2x1
jax: 0.10.0
libtpu: 0.0.40
codegen_flags: <defaults>
</compile_context>

<pallas_src>
import math
import numpy as np
import jax
import jax.numpy as jnp
from jax.experimental import pallas as pl
from jax.experimental.pallas import tpu as pltpu

N_QUBITS = 8
DIM = 2 ** N_QUBITS          # 256-dim statevector
N_CLASS = 2
N_QLAYERS = 1
TT_IN_MODES = (7, 16, 7)     # input dim 784
TT_OUT_MODES = (2, 2, 2)     # output dim 8 == N_QUBITS
TT_RANK = (1, 2, 2, 1)
IN_DIM = int(np.prod(TT_IN_MODES))

# 512-1024-row tiles keep the per-grid-step overhead well below the x-tile DMA
# time on all generations; capped to the (padded) batch for tiny batches.
DEFAULT_TILE_B = 1024
VMEM_LIMIT_BYTES = 40 << 20   # headroom for the 1024-row working set


def _round_up(n, m):
    return ((n + m - 1) // m) * m


def _choose_tile(bsz, tile_b):
    """Pick a sublane-aligned batch tile; prefer >=2 (even) tiles (v7x megacore)."""
    tb = min(tile_b, _round_up(bsz, 8))
    b_pad = _round_up(bsz, tb)
    if (b_pad // tb) % 2 == 1 and tb >= 16 and tb % 16 == 0:
        tb //= 2
        b_pad = _round_up(bsz, tb)
    return tb, b_pad


# --------------------------------------------------------------------------
# Pallas kernel: one batch tile of the whole forward pass.
# --------------------------------------------------------------------------
def vqc_finetune_kernel(x_ref, w_pre_ref, b_pre_ref, bits4_ref, sel_l_ref,
                        sel_r_ref, u_ref, zw2_ref, b_post_ref, out_ref):
    x = x_ref[...]                                                 # (TB, 784) bf16

    # pre_net (TTLinear collapsed to equivalent dense matrix), bf16 x f32-acc
    pre = jnp.dot(x, w_pre_ref[...],
                  preferred_element_type=jnp.float32) + b_pre_ref[...]   # (TB, 8)

    # q_in = sigmoid(pre) * pi/2 ; RY half-angles = q_in / 2
    half = jax.nn.sigmoid(pre) * (math.pi / 4.0)                   # (TB, 8)
    c = jnp.cos(half)
    s = jnp.sin(half)
    d = s - c                                                      # hoisted

    # RY(q_in) product state in split-kron form:
    #   state[k] = left[k >> 4] * right[k & 15]
    # left/right are 4-wire sub-products built on (TB, 16) lanes; the 16x lane
    # replication/tiling up to 256 lanes is done by two 0/1 selection matmuls
    # on the (otherwise idle) MXU instead of 8 blend passes over 256 lanes.
    bl = bits4_ref[...]                                            # (4, 16) f32
    left = c[:, 0:1] + bl[0:1, :] * d[:, 0:1]                      # (TB, 16)
    right = c[:, 4:5] + bl[0:1, :] * d[:, 4:5]                     # (TB, 16)
    for t in range(1, 4):
        bt = bl[t:t + 1, :]
        left = left * (c[:, t:t + 1] + bt * d[:, t:t + 1])
        right = right * (c[:, 4 + t:5 + t] + bt * d[:, 4 + t:5 + t])

    lrep = jnp.dot(left.astype(jnp.bfloat16), sel_l_ref[...],
                   preferred_element_type=jnp.float32)             # (TB, 256)
    rrep = jnp.dot(right.astype(jnp.bfloat16), sel_r_ref[...],
                   preferred_element_type=jnp.float32)             # (TB, 256)
    state = (lrep * rrep).astype(jnp.bfloat16)                     # (TB, 256)

    # trainable circuit block (input independent) as one fused 256x512 matrix
    # [U_re | U_im] in bf16; row-vector convention psi_out = psi_in @ U.
    y = jnp.dot(state, u_ref[...],
                preferred_element_type=jnp.float32)                # (TB, 512)

    # probs = re^2 + im^2 fused with MeasureAll(PauliZ) and post_net:
    #   logits = (y*y) @ [zw; zw] + b_post,  zw = Zsign @ Wpost (host-side)
    logits = jnp.dot(y * y, zw2_ref[...],
                     preferred_element_type=jnp.float32) + b_post_ref[...]

    # log_softmax over dim 1
    m = jnp.max(logits, axis=1, keepdims=True)
    z = logits - m
    lse = jnp.log(jnp.sum(jnp.exp(z), axis=1, keepdims=True))
    out_ref[...] = z - lse


def vqc_finetune_forward(x, w_pre, b_pre, bits4, sel_l, sel_r, u_cat, zw2,
                         b_post, *, tile_b=DEFAULT_TILE_B):
    bsz = x.shape[0]
    tb, b_pad = _choose_tile(bsz, tile_b)

    x = x.astype(jnp.bfloat16)                   # halve x HBM bytes (dominant DMA)
    if b_pad != bsz:
        x = jnp.pad(x, ((0, b_pad - bsz), (0, 0)))

    grid = (b_pad // tb,)
    out = pl.pallas_call(
        vqc_finetune_kernel,
        out_shape=jax.ShapeDtypeStruct((b_pad, N_CLASS), jnp.float32),
        grid_spec=pltpu.PrefetchScalarGridSpec(
            num_scalar_prefetch=0,
            grid=grid,
            in_specs=[
                # x: batch-tiled, double-buffered by the Pallas pipeline
                pl.BlockSpec((tb, IN_DIM), lambda i: (i, 0)),
                # weights / tables: constant index map -> DMA'd once, VMEM-resident
                pl.BlockSpec((IN_DIM, N_QUBITS), lambda i: (0, 0)),
                pl.BlockSpec((1, N_QUBITS), lambda i: (0, 0)),
                pl.BlockSpec((4, 16), lambda i: (0, 0)),
                pl.BlockSpec((16, DIM), lambda i: (0, 0)),
                pl.BlockSpec((16, DIM), lambda i: (0, 0)),
                pl.BlockSpec((DIM, 2 * DIM), lambda i: (0, 0)),
                pl.BlockSpec((2 * DIM, N_CLASS), lambda i: (0, 0)),
                pl.BlockSpec((1, N_CLASS), lambda i: (0, 0)),
            ],
            out_specs=pl.BlockSpec((tb, N_CLASS), lambda i: (i, 0)),
        ),
        compiler_params=pltpu.CompilerParams(
            # batch tiles are independent -> shard across both TCs on v7x
            dimension_semantics=("parallel",),
            vmem_limit_bytes=VMEM_LIMIT_BYTES),
    )(x, w_pre, b_pre, bits4, sel_l, sel_r, u_cat, zw2, b_post)
    return out[:bsz]


# --------------------------------------------------------------------------
# Parameter setup (glue, input independent).
# --------------------------------------------------------------------------
def make_params(key):
    ks = jax.random.split(key, 7)
    cores = []
    for i in range(3):
        shape = (TT_RANK[i], TT_IN_MODES[i], TT_OUT_MODES[i], TT_RANK[i + 1])
        cores.append(jax.random.normal(ks[i], shape, jnp.float32) * 0.3)
    b_pre = jax.random.normal(ks[3], (1, N_QUBITS), jnp.float32) * 0.1
    angles = jax.random.uniform(ks[4], (N_QLAYERS, 3, N_QUBITS), jnp.float32,
                                minval=0.0, maxval=2.0 * math.pi)
    w_post = jax.random.normal(ks[5], (N_QUBITS, N_CLASS), jnp.float32) * 0.5
    b_post = jax.random.normal(ks[6], (1, N_CLASS), jnp.float32) * 0.1
    return cores, b_pre, angles, w_post, b_post


def tt_to_dense(cores):
    # W[i1,i2,i3, o1,o2,o3] = sum_{r1,r2} c1[.,i1,o1,r1] c2[r1,i2,o2,r2] c3[r2,i3,o3,.]
    w = jnp.einsum('piaq,qjbr,rkcs->ijkabc', cores[0], cores[1], cores[2])
    return w.reshape(IN_DIM, N_QUBITS)


def _rx(t):
    c, s = np.cos(t / 2), np.sin(t / 2)
    return np.array([[c, -1j * s], [-1j * s, c]], dtype=np.complex128)


def _ry(t):
    c, s = np.cos(t / 2), np.sin(t / 2)
    return np.array([[c, -s], [s, c]], dtype=np.complex128)


def _rz(t):
    return np.array([[np.exp(-1j * t / 2), 0.0], [0.0, np.exp(1j * t / 2)]],
                    dtype=np.complex128)


def _embed_1q(g, wire):
    m = np.eye(1, dtype=np.complex128)
    for w in range(N_QUBITS):
        m = np.kron(m, g if w == wire else np.eye(2, dtype=np.complex128))
    return m


def _cnot(control, target):
    m = np.zeros((DIM, DIM), dtype=np.complex128)
    for k in range(DIM):
        bc = (k >> (N_QUBITS - 1 - control)) & 1
        nk = k ^ (bc << (N_QUBITS - 1 - target))
        m[nk, k] = 1.0
    return m


def build_vqc_unitary(angles):
    angles = np.asarray(angles)
    M = np.eye(DIM, dtype=np.complex128)
    for l in range(N_QLAYERS):
        for w in range(N_QUBITS):
            M = _embed_1q(_rx(angles[l, 0, w]), w) @ M
            M = _embed_1q(_ry(angles[l, 1, w]), w) @ M
            M = _embed_1q(_rz(angles[l, 2, w]), w) @ M
        for w in range(N_QUBITS):
            M = _cnot(w, (w + 1) % N_QUBITS) @ M
    U = M.T   # row-vector convention (plain transpose, not conjugate)
    return (jnp.asarray(U.real, jnp.float32), jnp.asarray(U.imag, jnp.float32))


def make_bits4():
    # bits4[t, i] = bit of 4-bit index i at position t (t=0 is MSB), as f32
    ts = np.arange(4)[:, None]
    ks = np.arange(16)[None, :]
    b = (ks >> (3 - ts)) & 1
    return jnp.asarray(b, jnp.float32)            # (4, 16)


def make_selectors():
    # 0/1 matrices implementing state[k] = left[k >> 4] * right[k & 15]
    k = np.arange(DIM)
    sel_l = (np.arange(16)[:, None] == (k >> 4)[None, :]).astype(np.float32)
    sel_r = (np.arange(16)[:, None] == (k & 15)[None, :]).astype(np.float32)
    return (jnp.asarray(sel_l, jnp.bfloat16), jnp.asarray(sel_r, jnp.bfloat16))


def make_zsign():
    ks = np.arange(DIM)[:, None]
    ws = np.arange(N_QUBITS)[None, :]
    z = 1.0 - 2.0 * ((ks >> (N_QUBITS - 1 - ws)) & 1)
    return jnp.asarray(z, jnp.float32)            # (256, 8)


# --------------------------------------------------------------------------
# Pure-JAX reference (same math and same dtypes as the kernel; no Pallas).
# --------------------------------------------------------------------------
def reference_forward(x, w_pre, b_pre, bits4, sel_l, sel_r, u_cat, zw2, b_post):
    x = x.astype(jnp.bfloat16)
    pre = jnp.dot(x, w_pre, preferred_element_type=jnp.float32) + b_pre
    half = jax.nn.sigmoid(pre) * (math.pi / 4.0)
    c, s = jnp.cos(half), jnp.sin(half)
    d = s - c
    left = c[:, 0:1] + bits4[0:1, :] * d[:, 0:1]
    right = c[:, 4:5] + bits4[0:1, :] * d[:, 4:5]
    for t in range(1, 4):
        bt = bits4[t:t + 1, :]
        left = left * (c[:, t:t + 1] + bt * d[:, t:t + 1])
        right = right * (c[:, 4 + t:5 + t] + bt * d[:, 4 + t:5 + t])
    lrep = jnp.dot(left.astype(jnp.bfloat16), sel_l,
                   preferred_element_type=jnp.float32)
    rrep = jnp.dot(right.astype(jnp.bfloat16), sel_r,
                   preferred_element_type=jnp.float32)
    state = (lrep * rrep).astype(jnp.bfloat16)
    y = jnp.dot(state, u_cat, preferred_element_type=jnp.float32)
    logits = jnp.dot(y * y, zw2, preferred_element_type=jnp.float32) + b_post
    return jax.nn.log_softmax(logits, axis=1)


if __name__ == "__main__":
    key = jax.random.PRNGKey(0)
    kx, kp = jax.random.split(key)

    B = 8
    x = jax.random.normal(kx, (B, IN_DIM), jnp.float32)      # (8, 784)

    cores, b_pre, angles, w_post, b_post = make_params(kp)
    w_pre = tt_to_dense(cores).astype(jnp.bfloat16)           # (784, 8) bf16
    u_re, u_im = build_vqc_unitary(angles)
    u_cat = jnp.concatenate([u_re, u_im], axis=1).astype(jnp.bfloat16)  # (256, 512)
    bits4 = make_bits4()                                      # (4, 16) f32
    sel_l, sel_r = make_selectors()                           # (16, 256) bf16 each
    zsign = make_zsign()                                      # (256, 8) f32
    zw = jnp.asarray(zsign @ w_post, jnp.float32)             # (256, 2) precomposed
    zw2 = jnp.concatenate([zw, zw], axis=0)                   # (512, 2): re & im halves
    b_pre = jnp.asarray(b_pre, jnp.float32)
    b_post = jnp.asarray(b_post, jnp.float32)

    out = vqc_finetune_forward(x, w_pre, b_pre, bits4, sel_l, sel_r,
                               u_cat, zw2, b_post)
    out = jax.block_until_ready(out)

    ref = reference_forward(x, w_pre, b_pre, bits4, sel_l, sel_r,
                            u_cat, zw2, b_post)
    assert out.shape == (B, N_CLASS)
    # bf16 matmul inputs with f32 accumulation -> relaxed tolerance vs f32-only.
    np.testing.assert_allclose(np.asarray(out), np.asarray(ref),
                               rtol=2e-2, atol=2e-2)
    print("KERNEL_OK")
</pallas_src>

<mosaic_0001>
module attributes {stable_mosaic.version = 11 : i64} {
  func.func @vqc_finetune_kernel(%arg0: i32, %arg1: memref<8x784xbf16, #tpu.memory_space<vmem>>, %arg2: memref<784x8xbf16, #tpu.memory_space<vmem>>, %arg3: memref<1x8xf32, #tpu.memory_space<vmem>>, %arg4: memref<4x16xf32, #tpu.memory_space<vmem>>, %arg5: memref<16x256xbf16, #tpu.memory_space<vmem>>, %arg6: memref<16x256xbf16, #tpu.memory_space<vmem>>, %arg7: memref<256x512xbf16, #tpu.memory_space<vmem>>, %arg8: memref<512x2xf32, #tpu.memory_space<vmem>>, %arg9: memref<1x2xf32, #tpu.memory_space<vmem>>, %arg10: memref<8x2xf32, #tpu.memory_space<vmem>>) attributes {dimension_semantics = [#tpu.dimension_semantics<parallel>], iteration_bounds = array<i64: 1>, scalar_prefetch = 0 : i64, scratch_operands = 0 : i64, tpu.core_type = #tpu.core_type<tc>, window_params = [{transform_indices = @transform_0, window_bounds = array<i64: 8, 784>}, {pipeline_mode = #tpu.pipeline_mode<synchronous>, transform_indices = @transform_1, window_bounds = array<i64: 784, 8>}, {pipeline_mode = #tpu.pipeline_mode<synchronous>, transform_indices = @transform_2, window_bounds = array<i64: 1, 8>}, {pipeline_mode = #tpu.pipeline_mode<synchronous>, transform_indices = @transform_3, window_bounds = array<i64: 4, 16>}, {pipeline_mode = #tpu.pipeline_mode<synchronous>, transform_indices = @transform_4, window_bounds = array<i64: 16, 256>}, {pipeline_mode = #tpu.pipeline_mode<synchronous>, transform_indices = @transform_5, window_bounds = array<i64: 16, 256>}, {pipeline_mode = #tpu.pipeline_mode<synchronous>, transform_indices = @transform_6, window_bounds = array<i64: 256, 512>}, {pipeline_mode = #tpu.pipeline_mode<synchronous>, transform_indices = @transform_7, window_bounds = array<i64: 512, 2>}, {pipeline_mode = #tpu.pipeline_mode<synchronous>, transform_indices = @transform_8, window_bounds = array<i64: 1, 2>}, {transform_indices = @transform_9, window_bounds = array<i64: 8, 2>}]} {
    %c0 = arith.constant 0 : index
    %c0_0 = arith.constant 0 : index
    %0 = vector.load %arg1[%c0, %c0_0] : memref<8x784xbf16, #tpu.memory_space<vmem>>, vector<8x784xbf16>
    %c0_1 = arith.constant 0 : index
    %c0_2 = arith.constant 0 : index
    %1 = vector.load %arg2[%c0_1, %c0_2] : memref<784x8xbf16, #tpu.memory_space<vmem>>, vector<784x8xbf16>
    %cst = arith.constant dense<0.000000e+00> : vector<8x8xf32>
    %2 = tpu.matmul %0, %1, %cst {dimension_numbers = #tpu.dot_dimension_numbers<[1], [0], [0], [1], [0, 0, 1, 1], [], []>} : vector<8x784xbf16>, vector<784x8xbf16>, vector<8x8xf32> -> vector<8x8xf32>
    %c0_3 = arith.constant 0 : index
    %c0_4 = arith.constant 0 : index
    %3 = vector.load %arg3[%c0_3, %c0_4] : memref<1x8xf32, #tpu.memory_space<vmem>>, vector<1x8xf32>
    %4 = vector.broadcast %3 : vector<1x8xf32> to vector<8x8xf32>
    %5 = arith.addf %2, %4 : vector<8x8xf32>
    %6 = arith.negf %5 : vector<8x8xf32>
    %7 = math.exp %6 : vector<8x8xf32>
    %cst_5 = arith.constant 1.000000e+00 : f32
    %8 = vector.broadcast %cst_5 : f32 to vector<8x8xf32>
    %9 = arith.addf %8, %7 : vector<8x8xf32>
    %10 = arith.divf %8, %9 : vector<8x8xf32>
    %cst_6 = arith.constant 0.785398185 : f32
    %11 = vector.broadcast %cst_6 : f32 to vector<8x8xf32>
    %12 = arith.mulf %10, %11 : vector<8x8xf32>
    %13 = math.cos %12 : vector<8x8xf32>
    %14 = math.sin %12 : vector<8x8xf32>
    %15 = arith.subf %14, %13 : vector<8x8xf32>
    %c0_7 = arith.constant 0 : index
    %c0_8 = arith.constant 0 : index
    %16 = vector.load %arg4[%c0_7, %c0_8] : memref<4x16xf32, #tpu.memory_space<vmem>>, vector<4x16xf32>
    %17 = vector.extract_strided_slice %13 {offsets = [0, 0], sizes = [8, 1], strides = [1, 1]} : vector<8x8xf32> to vector<8x1xf32>
    %18 = vector.extract_strided_slice %16 {offsets = [0, 0], sizes = [1, 16], strides = [1, 1]} : vector<4x16xf32> to vector<1x16xf32>
    %19 = vector.extract_strided_slice %15 {offsets = [0, 0], sizes = [8, 1], strides = [1, 1]} : vector<8x8xf32> to vector<8x1xf32>
    %20 = vector.broadcast %18 : vector<1x16xf32> to vector<8x16xf32>
    %21 = vector.broadcast %19 : vector<8x1xf32> to vector<8x16xf32>
    %22 = arith.mulf %20, %21 : vector<8x16xf32>
    %23 = vector.broadcast %17 : vector<8x1xf32> to vector<8x16xf32>
    %24 = arith.addf %23, %22 : vector<8x16xf32>
    %25 = vector.extract_strided_slice %13 {offsets = [0, 4], sizes = [8, 1], strides = [1, 1]} : vector<8x8xf32> to vector<8x1xf32>
    %26 = vector.extract_strided_slice %16 {offsets = [0, 0], sizes = [1, 16], strides = [1, 1]} : vector<4x16xf32> to vector<1x16xf32>
    %27 = vector.extract_strided_slice %15 {offsets = [0, 4], sizes = [8, 1], strides = [1, 1]} : vector<8x8xf32> to vector<8x1xf32>
    %28 = vector.broadcast %26 : vector<1x16xf32> to vector<8x16xf32>
    %29 = vector.broadcast %27 : vector<8x1xf32> to vector<8x16xf32>
    %30 = arith.mulf %28, %29 : vector<8x16xf32>
    %31 = vector.broadcast %25 : vector<8x1xf32> to vector<8x16xf32>
    %32 = arith.addf %31, %30 : vector<8x16xf32>
    %33 = vector.extract_strided_slice %16 {offsets = [1, 0], sizes = [1, 16], strides = [1, 1]} : vector<4x16xf32> to vector<1x16xf32>
    %34 = vector.extract_strided_slice %13 {offsets = [0, 1], sizes = [8, 1], strides = [1, 1]} : vector<8x8xf32> to vector<8x1xf32>
    %35 = vector.extract_strided_slice %15 {offsets = [0, 1], sizes = [8, 1], strides = [1, 1]} : vector<8x8xf32> to vector<8x1xf32>
    %36 = vector.broadcast %33 : vector<1x16xf32> to vector<8x16xf32>
    %37 = vector.broadcast %35 : vector<8x1xf32> to vector<8x16xf32>
    %38 = arith.mulf %36, %37 : vector<8x16xf32>
    %39 = vector.broadcast %34 : vector<8x1xf32> to vector<8x16xf32>
    %40 = arith.addf %39, %38 : vector<8x16xf32>
    %41 = arith.mulf %24, %40 : vector<8x16xf32>
    %42 = vector.extract_strided_slice %13 {offsets = [0, 5], sizes = [8, 1], strides = [1, 1]} : vector<8x8xf32> to vector<8x1xf32>
    %43 = vector.extract_strided_slice %15 {offsets = [0, 5], sizes = [8, 1], strides = [1, 1]} : vector<8x8xf32> to vector<8x1xf32>
    %44 = vector.broadcast %33 : vector<1x16xf32> to vector<8x16xf32>
    %45 = vector.broadcast %43 : vector<8x1xf32> to vector<8x16xf32>
    %46 = arith.mulf %44, %45 : vector<8x16xf32>
    %47 = vector.broadcast %42 : vector<8x1xf32> to vector<8x16xf32>
    %48 = arith.addf %47, %46 : vector<8x16xf32>
    %49 = arith.mulf %32, %48 : vector<8x16xf32>
    %50 = vector.extract_strided_slice %16 {offsets = [2, 0], sizes = [1, 16], strides = [1, 1]} : vector<4x16xf32> to vector<1x16xf32>
    %51 = vector.extract_strided_slice %13 {offsets = [0, 2], sizes = [8, 1], strides = [1, 1]} : vector<8x8xf32> to vector<8x1xf32>
    %52 = vector.extract_strided_slice %15 {offsets = [0, 2], sizes = [8, 1], strides = [1, 1]} : vector<8x8xf32> to vector<8x1xf32>
    %53 = vector.broadcast %50 : vector<1x16xf32> to vector<8x16xf32>
    %54 = vector.broadcast %52 : vector<8x1xf32> to vector<8x16xf32>
    %55 = arith.mulf %53, %54 : vector<8x16xf32>
    %56 = vector.broadcast %51 : vector<8x1xf32> to vector<8x16xf32>
    %57 = arith.addf %56, %55 : vector<8x16xf32>
    %58 = arith.mulf %41, %57 : vector<8x16xf32>
    %59 = vector.extract_strided_slice %13 {offsets = [0, 6], sizes = [8, 1], strides = [1, 1]} : vector<8x8xf32> to vector<8x1xf32>
    %60 = vector.extract_strided_slice %15 {offsets = [0, 6], sizes = [8, 1], strides = [1, 1]} : vector<8x8xf32> to vector<8x1xf32>
    %61 = vector.broadcast %50 : vector<1x16xf32> to vector<8x16xf32>
    %62 = vector.broadcast %60 : vector<8x1xf32> to vector<8x16xf32>
    %63 = arith.mulf %61, %62 : vector<8x16xf32>
    %64 = vector.broadcast %59 : vector<8x1xf32> to vector<8x16xf32>
    %65 = arith.addf %64, %63 : vector<8x16xf32>
    %66 = arith.mulf %49, %65 : vector<8x16xf32>
    %67 = vector.extract_strided_slice %16 {offsets = [3, 0], sizes = [1, 16], strides = [1, 1]} : vector<4x16xf32> to vector<1x16xf32>
    %68 = vector.extract_strided_slice %13 {offsets = [0, 3], sizes = [8, 1], strides = [1, 1]} : vector<8x8xf32> to vector<8x1xf32>
    %69 = vector.extract_strided_slice %15 {offsets = [0, 3], sizes = [8, 1], strides = [1, 1]} : vector<8x8xf32> to vector<8x1xf32>
    %70 = vector.broadcast %67 : vector<1x16xf32> to vector<8x16xf32>
    %71 = vector.broadcast %69 : vector<8x1xf32> to vector<8x16xf32>
    %72 = arith.mulf %70, %71 : vector<8x16xf32>
    %73 = vector.broadcast %68 : vector<8x1xf32> to vector<8x16xf32>
    %74 = arith.addf %73, %72 : vector<8x16xf32>
    %75 = arith.mulf %58, %74 : vector<8x16xf32>
    %76 = vector.extract_strided_slice %13 {offsets = [0, 7], sizes = [8, 1], strides = [1, 1]} : vector<8x8xf32> to vector<8x1xf32>
    %77 = vector.extract_strided_slice %15 {offsets = [0, 7], sizes = [8, 1], strides = [1, 1]} : vector<8x8xf32> to vector<8x1xf32>
    %78 = vector.broadcast %67 : vector<1x16xf32> to vector<8x16xf32>
    %79 = vector.broadcast %77 : vector<8x1xf32> to vector<8x16xf32>
    %80 = arith.mulf %78, %79 : vector<8x16xf32>
    %81 = vector.broadcast %76 : vector<8x1xf32> to vector<8x16xf32>
    %82 = arith.addf %81, %80 : vector<8x16xf32>
    %83 = arith.mulf %66, %82 : vector<8x16xf32>
    %84 = arith.truncf %75 : vector<8x16xf32> to vector<8x16xbf16>
    %c0_9 = arith.constant 0 : index
    %c0_10 = arith.constant 0 : index
    %85 = vector.load %arg5[%c0_9, %c0_10] : memref<16x256xbf16, #tpu.memory_space<vmem>>, vector<16x256xbf16>
    %cst_11 = arith.constant dense<0.000000e+00> : vector<8x256xf32>
    %86 = tpu.matmul %84, %85, %cst_11 {dimension_numbers = #tpu.dot_dimension_numbers<[1], [0], [0], [1], [0, 0, 1, 1], [], []>} : vector<8x16xbf16>, vector<16x256xbf16>, vector<8x256xf32> -> vector<8x256xf32>
    %87 = arith.truncf %83 : vector<8x16xf32> to vector<8x16xbf16>
    %c0_12 = arith.constant 0 : index
    %c0_13 = arith.constant 0 : index
    %88 = vector.load %arg6[%c0_12, %c0_13] : memref<16x256xbf16, #tpu.memory_space<vmem>>, vector<16x256xbf16>
    %cst_14 = arith.constant dense<0.000000e+00> : vector<8x256xf32>
    %89 = tpu.matmul %87, %88, %cst_14 {dimension_numbers = #tpu.dot_dimension_numbers<[1], [0], [0], [1], [0, 0, 1, 1], [], []>} : vector<8x16xbf16>, vector<16x256xbf16>, vector<8x256xf32> -> vector<8x256xf32>
    %90 = arith.mulf %86, %89 : vector<8x256xf32>
    %91 = arith.truncf %90 : vector<8x256xf32> to vector<8x256xbf16>
    %c0_15 = arith.constant 0 : index
    %c0_16 = arith.constant 0 : index
    %92 = vector.load %arg7[%c0_15, %c0_16] : memref<256x512xbf16, #tpu.memory_space<vmem>>, vector<256x512xbf16>
    %cst_17 = arith.constant dense<0.000000e+00> : vector<8x512xf32>
    %93 = tpu.matmul %91, %92, %cst_17 {dimension_numbers = #tpu.dot_dimension_numbers<[1], [0], [0], [1], [0, 0, 1, 1], [], []>} : vector<8x256xbf16>, vector<256x512xbf16>, vector<8x512xf32> -> vector<8x512xf32>
    %94 = arith.mulf %93, %93 : vector<8x512xf32>
    %c0_18 = arith.constant 0 : index
    %c0_19 = arith.constant 0 : index
    %95 = vector.load %arg8[%c0_18, %c0_19] : memref<512x2xf32, #tpu.memory_space<vmem>>, vector<512x2xf32>
    %cst_20 = arith.constant dense<0.000000e+00> : vector<8x2xf32>
    %96 = tpu.matmul %94, %95, %cst_20 {dimension_numbers = #tpu.dot_dimension_numbers<[1], [0], [0], [1], [0, 0, 1, 1], [], []>} : vector<8x512xf32>, vector<512x2xf32>, vector<8x2xf32> -> vector<8x2xf32>
    %c0_21 = arith.constant 0 : index
    %c0_22 = arith.constant 0 : index
    %97 = vector.load %arg9[%c0_21, %c0_22] : memref<1x2xf32, #tpu.memory_space<vmem>>, vector<1x2xf32>
    %98 = vector.broadcast %97 : vector<1x2xf32> to vector<8x2xf32>
    %99 = arith.addf %96, %98 : vector<8x2xf32>
    %cst_23 = arith.constant dense<0xFF800000> : vector<8xf32>
    %100 = vector.multi_reduction <maximumf>, %99, %cst_23 [1] : vector<8x2xf32> to vector<8xf32>
    %101 = vector.shape_cast %100 : vector<8xf32> to vector<8x1xf32>
    %102 = vector.broadcast %101 : vector<8x1xf32> to vector<8x2xf32>
    %103 = arith.subf %99, %102 : vector<8x2xf32>
    %104 = math.exp %103 : vector<8x2xf32>
    %cst_24 = arith.constant dense<0.000000e+00> : vector<8xf32>
    %105 = vector.multi_reduction <add>, %104, %cst_24 [1] : vector<8x2xf32> to vector<8xf32>
    %106 = vector.shape_cast %105 : vector<8xf32> to vector<8x1xf32>
    %107 = math.log %106 : vector<8x1xf32>
    %108 = vector.broadcast %107 : vector<8x1xf32> to vector<8x2xf32>
    %109 = arith.subf %103, %108 : vector<8x2xf32>
    %c0_25 = arith.constant 0 : index
    %c0_26 = arith.constant 0 : index
    %110 = vector.load %arg10[%c0_25, %c0_26] : memref<8x2xf32, #tpu.memory_space<vmem>>, vector<8x2xf32>
    tpu.vector_store %arg10[%c0_25, %c0_26], %109 {strides = array<i32>} : memref<8x2xf32, #tpu.memory_space<vmem>>, vector<8x2xf32>,
    return
  }
  func.func @transform_0(%arg0: i32) -> (i32, i32) {
    %c0_i32 = arith.constant 0 : i32
    %c0_i32_0 = arith.constant 0 : i32
    return %arg0, %c0_i32 : i32, i32
  }
  func.func @transform_1(%arg0: i32) -> (i32, i32) {
    %c0_i32 = arith.constant 0 : i32
    %c0_i32_0 = arith.constant 0 : i32
    %c0_i32_1 = arith.constant 0 : i32
    return %c0_i32, %c0_i32_0 : i32, i32
  }
  func.func @transform_2(%arg0: i32) -> (i32, i32) {
    %c0_i32 = arith.constant 0 : i32
    %c0_i32_0 = arith.constant 0 : i32
    %c0_i32_1 = arith.constant 0 : i32
    return %c0_i32, %c0_i32_0 : i32, i32
  }
  func.func @transform_3(%arg0: i32) -> (i32, i32) {
    %c0_i32 = arith.constant 0 : i32
    %c0_i32_0 = arith.constant 0 : i32
    %c0_i32_1 = arith.constant 0 : i32
    return %c0_i32, %c0_i32_0 : i32, i32
  }
  func.func @transform_4(%arg0: i32) -> (i32, i32) {
    %c0_i32 = arith.constant 0 : i32
    %c0_i32_0 = arith.constant 0 : i32
    %c0_i32_1 = arith.constant 0 : i32
    return %c0_i32, %c0_i32_0 : i32, i32
  }
  func.func @transform_5(%arg0: i32) -> (i32, i32) {
    %c0_i32 = arith.constant 0 : i32
    %c0_i32_0 = arith.constant 0 : i32
    %c0_i32_1 = arith.constant 0 : i32
    return %c0_i32, %c0_i32_0 : i32, i32
  }
  func.func @transform_6(%arg0: i32) -> (i32, i32) {
    %c0_i32 = arith.constant 0 : i32
    %c0_i32_0 = arith.constant 0 : i32
    %c0_i32_1 = arith.constant 0 : i32
    return %c0_i32, %c0_i32_0 : i32, i32
  }
  func.func @transform_7(%arg0: i32) -> (i32, i32) {
    %c0_i32 = arith.constant 0 : i32
    %c0_i32_0 = arith.constant 0 : i32
    %c0_i32_1 = arith.constant 0 : i32
    return %c0_i32, %c0_i32_0 : i32, i32
  }
  func.func @transform_8(%arg0: i32) -> (i32, i32) {
    %c0_i32 = arith.constant 0 : i32
    %c0_i32_0 = arith.constant 0 : i32
    %c0_i32_1 = arith.constant 0 : i32
    return %c0_i32, %c0_i32_0 : i32, i32
  }
  func.func @transform_9(%arg0: i32) -> (i32, i32) {
    %c0_i32 = arith.constant 0 : i32
    %c0_i32_0 = arith.constant 0 : i32
    return %arg0, %c0_i32 : i32, i32
  }
}

</mosaic_0001>

<llo_original>
// kernel: tpu_custom_call.1
$region0: #{tpu_custom_call.1}
  #allocation0 [shape = 'u32[]', space=smem, size = 0x4, offset = 0x4, fixed_abs, tag = 'smem constant byte address 0x4 - core index']
  #allocation1 [shape = 'u32[144,128]{1,0:T(1,128)}', space=vmem, size = 0x12000, scoped, tag = 'internal scratch']
  %s0 = inlined_call_operand.vmem [shape: bf16[8,784], index: 0, kind: input, shape index: {}]
  %s1 = inlined_call_operand.vmem [shape: bf16[784,8], index: 1, kind: input, shape index: {}]
  %s2 = inlined_call_operand.vmem [shape: f32[1,8], index: 2, kind: input, shape index: {}]
  %s3 = inlined_call_operand.vmem [shape: f32[4,16], index: 3, kind: input, shape index: {}]
  %s4 = inlined_call_operand.vmem [shape: bf16[16,256], index: 4, kind: input, shape index: {}]
  %s5 = inlined_call_operand.vmem [shape: bf16[16,256], index: 5, kind: input, shape index: {}]
  %s6 = inlined_call_operand.vmem [shape: bf16[256,512], index: 6, kind: input, shape index: {}]
  %s7 = inlined_call_operand.vmem [shape: f32[512,2], index: 7, kind: input, shape index: {}]
  %s8 = inlined_call_operand.vmem [shape: f32[1,2], index: 8, kind: input, shape index: {}]
  %s9 = inlined_call_operand.vmem [shape: f32[8,2], index: 9, kind: output, shape index: {}]
  %s10 = sld [smem:[#allocation0]]
  $region46: #{tpu_custom_call.1} parent=0
    _
  %s12 = ssub.s32 1, %s10
  %s13 = scalar_select 0, %s12, %s10
  // Predicated region
  $region2: #{tpu_custom_call.1} parent=0 // pred_check
    _
  $region3: #{tpu_custom_call.1} parent=0 // pred_check_branch
    %15 = sbr.rel (0) target = $region5
  $region4: #{tpu_custom_call.1} parent=0 // pred_region
    _
  $region5: #{tpu_custom_call.1} parent=0 // pred_fallthru
    _
  // Predicated region
  $region6: #{tpu_custom_call.1} parent=0 // pred_check
    _
  $region7: #{tpu_custom_call.1} parent=0 // pred_check_branch
    %17 = sbr.rel (0) target = $region9
  $region8: #{tpu_custom_call.1} parent=0 // pred_region
    _
  $region9: #{tpu_custom_call.1} parent=0 // pred_fallthru
    _
  // Predicated region
  $region10: #{tpu_custom_call.1} parent=0 // pred_check
    _
  $region11: #{tpu_custom_call.1} parent=0 // pred_check_branch
    %19 = sbr.rel (0) target = $region13
  $region12: #{tpu_custom_call.1} parent=0 // pred_region
    _
  $region13: #{tpu_custom_call.1} parent=0 // pred_fallthru
    _
  // Predicated region
  $region14: #{tpu_custom_call.1} parent=0 // pred_check
    _
  $region15: #{tpu_custom_call.1} parent=0 // pred_check_branch
    %21 = sbr.rel (0) target = $region17
  $region16: #{tpu_custom_call.1} parent=0 // pred_region
    _
  $region17: #{tpu_custom_call.1} parent=0 // pred_fallthru
    _
  // Predicated region
  $region18: #{tpu_custom_call.1} parent=0 // pred_check
    _
  $region19: #{tpu_custom_call.1} parent=0 // pred_check_branch
    %23 = sbr.rel (0) target = $region21
  $region20: #{tpu_custom_call.1} parent=0 // pred_region
    _
  $region21: #{tpu_custom_call.1} parent=0 // pred_fallthru
    _
  // Predicated region
  $region22: #{tpu_custom_call.1} parent=0 // pred_check
    _
  $region23: #{tpu_custom_call.1} parent=0 // pred_check_branch
    %25 = sbr.rel (0) target = $region25
  $region24: #{tpu_custom_call.1} parent=0 // pred_region
    _
  $region25: #{tpu_custom_call.1} parent=0 // pred_fallthru
    _
  // Predicated region
  $region26: #{tpu_custom_call.1} parent=0 // pred_check
    _
  $region27: #{tpu_custom_call.1} parent=0 // pred_check_branch
    %27 = sbr.rel (0) target = $region29
  $region28: #{tpu_custom_call.1} parent=0 // pred_region
    _
  $region29: #{tpu_custom_call.1} parent=0 // pred_fallthru
    _
  // Predicated region
  $region30: #{tpu_custom_call.1} parent=0 // pred_check
    _
  $region31: #{tpu_custom_call.1} parent=0 // pred_check_branch
    %29 = sbr.rel (0) target = $region33
  $region32: #{tpu_custom_call.1} parent=0 // pred_region
    _
  $region33: #{tpu_custom_call.1} parent=0 // pred_fallthru
    _
  // Predicated region
  $region34: #{tpu_custom_call.1} parent=0 // pred_check
    _
  $region35: #{tpu_custom_call.1} parent=0 // pred_check_branch
    %31 = sbr.rel (0) target = $region37
  $region36: #{tpu_custom_call.1} parent=0 // pred_region
    _
  $region37: #{tpu_custom_call.1} parent=0 // pred_fallthru
    _
  %v33 = vld [vmem:[%s0] sm:$0xff]
  %v34 = vld [vmem:[%s0 + $0x8] sm:$0xff]
  %v35 = vld [vmem:[%s0 + $0x10] sm:$0xff]
  %v36 = vld [vmem:[%s0 + $0x18] sm:$0xf]
  %v37 = vld [vmem:[%s1] sm:$0xf]
  %v38 = vld [vmem:[%s1 + $0x4] sm:$0xf]
  %v39 = vld [vmem:[%s1 + $0x8] sm:$0xf]
  %v40 = vld [vmem:[%s1 + $0xc] sm:$0xf]
  %v41 = vld [vmem:[%s1 + $0x10] sm:$0xf]
  %v42 = vld [vmem:[%s1 + $0x14] sm:$0xf]
  %v43 = vld [vmem:[%s1 + $0x18] sm:$0xf]
  %v44 = vld [vmem:[%s1 + $0x1c] sm:$0xf]
  %v45 = vld [vmem:[%s1 + $0x20] sm:$0xf]
  %v46 = vld [vmem:[%s1 + $0x24] sm:$0xf]
  %v47 = vld [vmem:[%s1 + $0x28] sm:$0xf]
  %v48 = vld [vmem:[%s1 + $0x2c] sm:$0xf]
  %v49 = vld [vmem:[%s1 + $0x30] sm:$0xf]
  %v50 = vld [vmem:[%s1 + $0x34] sm:$0xf]
  %v51 = vld [vmem:[%s1 + $0x38] sm:$0xf]
  %v52 = vld [vmem:[%s1 + $0x3c] sm:$0xf]
  %v53 = vld [vmem:[%s1 + $0x40] sm:$0xf]
  %v54 = vld [vmem:[%s1 + $0x44] sm:$0xf]
  %v55 = vld [vmem:[%s1 + $0x48] sm:$0xf]
  %v56 = vld [vmem:[%s1 + $0x4c] sm:$0xf]
  %v57 = vld [vmem:[%s1 + $0x50] sm:$0xf]
  %v58 = vld [vmem:[%s1 + $0x54] sm:$0xf]
  %v59 = vld [vmem:[%s1 + $0x58] sm:$0xf]
  %v60 = vld [vmem:[%s1 + $0x5c] sm:$0xf]
  %v61 = vld [vmem:[%s1 + $0x60] sm:$0xf]
  %v62 = vld [vmem:[%s1 + $0x64] sm:$0xf]
  %v63 = vld [vmem:[%s1 + $0x68] sm:$0xf]
  %v64 = vld [vmem:[%s1 + $0x6c] sm:$0xf]
  %v65 = vld [vmem:[%s1 + $0x70] sm:$0xf]
  %v66 = vld [vmem:[%s1 + $0x74] sm:$0xf]
  %v67 = vld [vmem:[%s1 + $0x78] sm:$0xf]
  %v68 = vld [vmem:[%s1 + $0x7c] sm:$0xf]
  %v69 = vld [vmem:[%s1 + $0x80] sm:$0xf]
  %v70 = vld [vmem:[%s1 + $0x84] sm:$0xf]
  %v71 = vld [vmem:[%s1 + $0x88] sm:$0xf]
  %v72 = vld [vmem:[%s1 + $0x8c] sm:$0xf]
  %v73 = vld [vmem:[%s1 + $0x90] sm:$0xf]
  %v74 = vld [vmem:[%s1 + $0x94] sm:$0xf]
  %v75 = vld [vmem:[%s1 + $0x98] sm:$0xf]
  %v76 = vld [vmem:[%s1 + $0x9c] sm:$0xf]
  %v77 = vld [vmem:[%s1 + $0xa0] sm:$0xf]
  %v78 = vld [vmem:[%s1 + $0xa4] sm:$0xf]
  %v79 = vld [vmem:[%s1 + $0xa8] sm:$0xf]
  %v80 = vld [vmem:[%s1 + $0xac] sm:$0xf]
  %v81 = vld [vmem:[%s1 + $0xb0] sm:$0xf]
  %v82 = vld [vmem:[%s1 + $0xb4] sm:$0xf]
  %v83 = vld [vmem:[%s1 + $0xb8] sm:$0xf]
  %v84 = vld [vmem:[%s1 + $0xbc] sm:$0xf]
  %v85 = vld [vmem:[%s1 + $0xc0] sm:$0xf]
  %v86 = vld [vmem:[%s1 + $0xc4] sm:$0xf]
  %v87 = vld [vmem:[%s1 + $0xc8] sm:$0xf]
  %v88 = vld [vmem:[%s1 + $0xcc] sm:$0xf]
  %v89 = vld [vmem:[%s1 + $0xd0] sm:$0xf]
  %v90 = vld [vmem:[%s1 + $0xd4] sm:$0xf]
  %v91 = vld [vmem:[%s1 + $0xd8] sm:$0xf]
  %v92 = vld [vmem:[%s1 + $0xdc] sm:$0xf]
  %v93 = vld [vmem:[%s1 + $0xe0] sm:$0xf]
  %v94 = vld [vmem:[%s1 + $0xe4] sm:$0xf]
  %v95 = vld [vmem:[%s1 + $0xe8] sm:$0xf]
  %v96 = vld [vmem:[%s1 + $0xec] sm:$0xf]
  %v97 = vld [vmem:[%s1 + $0xf0] sm:$0xf]
  %v98 = vld [vmem:[%s1 + $0xf4] sm:$0xf]
  %v99 = vld [vmem:[%s1 + $0xf8] sm:$0xf]
  %v100 = vld [vmem:[%s1 + $0xfc] sm:$0xf]
  %v101 = vld [vmem:[%s1 + $0x100] sm:$0xf]
  %v102 = vld [vmem:[%s1 + $0x104] sm:$0xf]
  %v103 = vld [vmem:[%s1 + $0x108] sm:$0xf]
  %v104 = vld [vmem:[%s1 + $0x10c] sm:$0xf]
  %v105 = vld [vmem:[%s1 + $0x110] sm:$0xf]
  %v106 = vld [vmem:[%s1 + $0x114] sm:$0xf]
  %v107 = vld [vmem:[%s1 + $0x118] sm:$0xf]
  %v108 = vld [vmem:[%s1 + $0x11c] sm:$0xf]
  %v109 = vld [vmem:[%s1 + $0x120] sm:$0xf]
  %v110 = vld [vmem:[%s1 + $0x124] sm:$0xf]
  %v111 = vld [vmem:[%s1 + $0x128] sm:$0xf]
  %v112 = vld [vmem:[%s1 + $0x12c] sm:$0xf]
  %v113 = vld [vmem:[%s1 + $0x130] sm:$0xf]
  %v114 = vld [vmem:[%s1 + $0x134] sm:$0xf]
  %v115 = vld [vmem:[%s1 + $0x138] sm:$0xf]
  %v116 = vld [vmem:[%s1 + $0x13c] sm:$0xf]
  %v117 = vld [vmem:[%s1 + $0x140] sm:$0xf]
  %v118 = vld [vmem:[%s1 + $0x144] sm:$0xf]
  %v119 = vld [vmem:[%s1 + $0x148] sm:$0xf]
  %v120 = vld [vmem:[%s1 + $0x14c] sm:$0xf]
  %v121 = vld [vmem:[%s1 + $0x150] sm:$0xf]
  %v122 = vld [vmem:[%s1 + $0x154] sm:$0xf]
  %v123 = vld [vmem:[%s1 + $0x158] sm:$0xf]
  %v124 = vld [vmem:[%s1 + $0x15c] sm:$0xf]
  %v125 = vld [vmem:[%s1 + $0x160] sm:$0xf]
  %v126 = vld [vmem:[%s1 + $0x164] sm:$0xf]
  %v127 = vld [vmem:[%s1 + $0x168] sm:$0xf]
  %v128 = vld [vmem:[%s1 + $0x16c] sm:$0xf]
  %v129 = vld [vmem:[%s1 + $0x170] sm:$0xf]
  %v130 = vld [vmem:[%s1 + $0x174] sm:$0xf]
  %v131 = vld [vmem:[%s1 + $0x178] sm:$0xf]
  %v132 = vld [vmem:[%s1 + $0x17c] sm:$0xf]
  %v133 = vld [vmem:[%s1 + $0x180] sm:$0xf]
  %v134 = vld [vmem:[%s1 + $0x184] sm:$0xf]
  %v135 = vld [vmem:[%s2] sm:$0x1]
  %v137 = vlaneseq
  %v138 = vshrl.u32 %v137, 7
  %v139 = vsub.s32 0, %v138
  %v140 = vrot.slane %v135, %v139
  %v146 = vunpack.c.l.b16 %v33
  %v147 = vunpack.c.h.b16 %v33
  %v148 = vunpack.c.l.b16 %v34
  %v149 = vunpack.c.h.b16 %v34
  %v150 = vunpack.c.l.b16 %v35
  %v151 = vunpack.c.h.b16 %v35
  %v152 = vunpack.c.l.b16 %v36
  %v153 = vpack.c.b16 %v146, %v146
  %v154 = vpack.c.b16 %v147, %v147
  %v155 = vpack.c.b16 %v148, %v148
  %v156 = vpack.c.b16 %v149, %v149
  %v157 = vpack.c.b16 %v150, %v150
  %v158 = vpack.c.b16 %v151, %v151
  %v159 = vpack.c.b16 %v152, %v152
  %v264 = vunpack.c.l.b16 %v37
  %v265 = vunpack.c.l.b16 %v38
  %v266 = vunpack.c.l.b16 %v39
  %v267 = vunpack.c.l.b16 %v40
  %v268 = vunpack.c.l.b16 %v41
  %v269 = vunpack.c.l.b16 %v42
  %v270 = vunpack.c.l.b16 %v43
  %v271 = vunpack.c.l.b16 %v44
  %v272 = vunpack.c.l.b16 %v45
  %v273 = vunpack.c.l.b16 %v46
  %v274 = vunpack.c.l.b16 %v47
  %v275 = vunpack.c.l.b16 %v48
  %v276 = vunpack.c.l.b16 %v49
  %v277 = vunpack.c.l.b16 %v50
  %v278 = vunpack.c.l.b16 %v51
  %v279 = vunpack.c.l.b16 %v52
  %v280 = vunpack.c.l.b16 %v53
  %v281 = vunpack.c.l.b16 %v54
  %v282 = vunpack.c.l.b16 %v55
  %v283 = vunpack.c.l.b16 %v56
  %v284 = vunpack.c.l.b16 %v57
  %v285 = vunpack.c.l.b16 %v58
  %v286 = vunpack.c.l.b16 %v59
  %v287 = vunpack.c.l.b16 %v60
  %v288 = vunpack.c.l.b16 %v61
  %v289 = vunpack.c.l.b16 %v62
  %v290 = vunpack.c.l.b16 %v63
  %v291 = vunpack.c.l.b16 %v64
  %v292 = vunpack.c.l.b16 %v65
  %v293 = vunpack.c.l.b16 %v66
  %v294 = vunpack.c.l.b16 %v67
  %v295 = vunpack.c.l.b16 %v68
  %v296 = vunpack.c.l.b16 %v69
  %v297 = vunpack.c.l.b16 %v70
  %v298 = vunpack.c.l.b16 %v71
  %v299 = vunpack.c.l.b16 %v72
  %v300 = vunpack.c.l.b16 %v73
  %v301 = vunpack.c.l.b16 %v74
  %v302 = vunpack.c.l.b16 %v75
  %v303 = vunpack.c.l.b16 %v76
  %v304 = vunpack.c.l.b16 %v77
  %v305 = vunpack.c.l.b16 %v78
  %v306 = vunpack.c.l.b16 %v79
  %v307 = vunpack.c.l.b16 %v80
  %v308 = vunpack.c.l.b16 %v81
  %v309 = vunpack.c.l.b16 %v82
  %v310 = vunpack.c.l.b16 %v83
  %v311 = vunpack.c.l.b16 %v84
  %v312 = vunpack.c.l.b16 %v85
  %v313 = vunpack.c.l.b16 %v86
  %v314 = vunpack.c.l.b16 %v87
  %v315 = vunpack.c.l.b16 %v88
  %v316 = vunpack.c.l.b16 %v89
  %v317 = vunpack.c.l.b16 %v90
  %v318 = vunpack.c.l.b16 %v91
  %v319 = vunpack.c.l.b16 %v92
  %v320 = vunpack.c.l.b16 %v93
  %v321 = vunpack.c.l.b16 %v94
  %v322 = vunpack.c.l.b16 %v95
  %v323 = vunpack.c.l.b16 %v96
  %v324 = vunpack.c.l.b16 %v97
  %v325 = vunpack.c.l.b16 %v98
  %v326 = vunpack.c.l.b16 %v99
  %v327 = vunpack.c.l.b16 %v100
  %v328 = vunpack.c.l.b16 %v101
  %v329 = vunpack.c.l.b16 %v102
  %v330 = vunpack.c.l.b16 %v103
  %v331 = vunpack.c.l.b16 %v104
  %v332 = vunpack.c.l.b16 %v105
  %v333 = vunpack.c.l.b16 %v106
  %v334 = vunpack.c.l.b16 %v107
  %v335 = vunpack.c.l.b16 %v108
  %v336 = vunpack.c.l.b16 %v109
  %v337 = vunpack.c.l.b16 %v110
  %v338 = vunpack.c.l.b16 %v111
  %v339 = vunpack.c.l.b16 %v112
  %v340 = vunpack.c.l.b16 %v113
  %v341 = vunpack.c.l.b16 %v114
  %v342 = vunpack.c.l.b16 %v115
  %v343 = vunpack.c.l.b16 %v116
  %v344 = vunpack.c.l.b16 %v117
  %v345 = vunpack.c.l.b16 %v118
  %v346 = vunpack.c.l.b16 %v119
  %v347 = vunpack.c.l.b16 %v120
  %v348 = vunpack.c.l.b16 %v121
  %v349 = vunpack.c.l.b16 %v122
  %v350 = vunpack.c.l.b16 %v123
  %v351 = vunpack.c.l.b16 %v124
  %v352 = vunpack.c.l.b16 %v125
  %v353 = vunpack.c.l.b16 %v126
  %v354 = vunpack.c.l.b16 %v127
  %v355 = vunpack.c.l.b16 %v128
  %v356 = vunpack.c.l.b16 %v129
  %v357 = vunpack.c.l.b16 %v130
  %v358 = vunpack.c.l.b16 %v131
  %v359 = vunpack.c.l.b16 %v132
  %v360 = vunpack.c.l.b16 %v133
  %v361 = vunpack.c.l.b16 %v134
  %v362 = vpack.c.b16 %v265, %v264
  %v363 = vpack.c.b16 %v267, %v266
  %v364 = vpack.c.b16 %v269, %v268
  %v365 = vpack.c.b16 %v271, %v270
  %v366 = vpack.c.b16 %v273, %v272
  %v367 = vpack.c.b16 %v275, %v274
  %v368 = vpack.c.b16 %v277, %v276
  %v369 = vpack.c.b16 %v279, %v278
  %v370 = vpack.c.b16 %v281, %v280
  %v371 = vpack.c.b16 %v283, %v282
  %v372 = vpack.c.b16 %v285, %v284
  %v373 = vpack.c.b16 %v287, %v286
  %v374 = vpack.c.b16 %v289, %v288
  %v375 = vpack.c.b16 %v291, %v290
  %v376 = vpack.c.b16 %v293, %v292
  %v377 = vpack.c.b16 %v295, %v294
  %v378 = vpack.c.b16 %v297, %v296
  %v379 = vpack.c.b16 %v299, %v298
  %v380 = vpack.c.b16 %v301, %v300
  %v381 = vpack.c.b16 %v303, %v302
  %v382 = vpack.c.b16 %v305, %v304
  %v383 = vpack.c.b16 %v307, %v306
  %v384 = vpack.c.b16 %v309, %v308
  %v385 = vpack.c.b16 %v311, %v310
  %v386 = vpack.c.b16 %v313, %v312
  %v387 = vpack.c.b16 %v315, %v314
  %v388 = vpack.c.b16 %v317, %v316
  %v389 = vpack.c.b16 %v319, %v318
  %v390 = vpack.c.b16 %v321, %v320
  %v391 = vpack.c.b16 %v323, %v322
  %v392 = vpack.c.b16 %v325, %v324
  %v393 = vpack.c.b16 %v327, %v326
  %v394 = vpack.c.b16 %v329, %v328
  %v395 = vpack.c.b16 %v331, %v330
  %v396 = vpack.c.b16 %v333, %v332
  %v397 = vpack.c.b16 %v335, %v334
  %v398 = vpack.c.b16 %v337, %v336
  %v399 = vpack.c.b16 %v339, %v338
  %v400 = vpack.c.b16 %v341, %v340
  %v401 = vpack.c.b16 %v343, %v342
  %v402 = vpack.c.b16 %v345, %v344
  %v403 = vpack.c.b16 %v347, %v346
  %v404 = vpack.c.b16 %v349, %v348
  %v405 = vpack.c.b16 %v351, %v350
  %v406 = vpack.c.b16 %v353, %v352
  %v407 = vpack.c.b16 %v355, %v354
  %v408 = vpack.c.b16 %v357, %v356
  %v409 = vpack.c.b16 %v359, %v358
  %v410 = vpack.c.b16 %v361, %v360
  %vm460 = vcmask 130048
  %v462 = vsel %vm460, %v159, 0
  %464 = vmatprep.subr.bf16.mxu0 0
  %465 = vmatpush1.bf16.msra.mxu0 %v362
  %466 = vmatprep.subr.bf16.mxu0 0
  %467 = vmatpush1.bf16.msra.mxu0 %v363
  %468 = vmatprep.subr.bf16.mxu0 0
  %469 = vmatpush1.bf16.msra.mxu0 %v364
  %470 = vmatprep.subr.bf16.mxu0 0
  %471 = vmatpush1.bf16.msra.mxu0 %v365
  %472 = vmatprep.subr.bf16.mxu0 0
  %473 = vmatpush1.bf16.msra.mxu0 %v366
  %474 = vmatprep.subr.bf16.mxu0 0
  %475 = vmatpush1.bf16.msra.mxu0 %v367
  %476 = vmatprep.subr.bf16.mxu0 0
  %477 = vmatpush1.bf16.msra.mxu0 %v368
  %478 = vmatprep.subr.bf16.mxu0 0
  %479 = vmatpush1.bf16.msra.mxu0 %v369
  %480 = vmatprep.subr.bf16.mxu0 0
  %481 = vmatpush1.bf16.msra.mxu0 %v370
  %482 = vmatprep.subr.bf16.mxu0 0
  %483 = vmatpush1.bf16.msra.mxu0 %v371
  %484 = vmatprep.subr.bf16.mxu0 0
  %485 = vmatpush1.bf16.msra.mxu0 %v372
  %486 = vmatprep.subr.bf16.mxu0 0
  %487 = vmatpush1.bf16.msra.mxu0 %v373
  %488 = vmatprep.subr.bf16.mxu0 0
  %489 = vmatpush1.bf16.msra.mxu0 %v374
  %490 = vmatprep.subr.bf16.mxu0 0
  %491 = vmatpush1.bf16.msra.mxu0 %v375
  %492 = vmatprep.subr.bf16.mxu0 0
  %493 = vmatpush1.bf16.msra.mxu0 %v376
  %494 = vmatprep.subr.bf16.mxu0 0
  %495 = vmatpush1.bf16.msra.mxu0 %v377
  %496 = vmatprep.mubr.bf16.mxu0 %v154
  %497 = vmatmul.mubr.bf16.gmra.mrb[0].mxu0 %v153
  %v498 = vpop.f32.mrb[0].mxu0
  %v499 = vadd.f32 %v140, %v498
  %v500 = vpop.f32.mrb[0].mxu0
  %v501 = vpop.f32.mrb[0].mxu0
  %v502 = vpop.f32.mrb[0].mxu0
  %503 = vdwg.mxu0
  %504 = vmatprep.subr.bf16.mxu0 0
  %505 = vmatpush1.bf16.msra.mxu0 %v378
  %506 = vmatprep.subr.bf16.mxu0 0
  %507 = vmatpush1.bf16.msra.mxu0 %v379
  %508 = vmatprep.subr.bf16.mxu0 0
  %509 = vmatpush1.bf16.msra.mxu0 %v380
  %510 = vmatprep.subr.bf16.mxu0 0
  %511 = vmatpush1.bf16.msra.mxu0 %v381
  %512 = vmatprep.subr.bf16.mxu0 0
  %513 = vmatpush1.bf16.msra.mxu0 %v382
  %514 = vmatprep.subr.bf16.mxu0 0
  %515 = vmatpush1.bf16.msra.mxu0 %v383
  %516 = vmatprep.subr.bf16.mxu0 0
  %517 = vmatpush1.bf16.msra.mxu0 %v384
  %518 = vmatprep.subr.bf16.mxu0 0
  %519 = vmatpush1.bf16.msra.mxu0 %v385
  %520 = vmatprep.subr.bf16.mxu0 0
  %521 = vmatpush1.bf16.msra.mxu0 %v386
  %522 = vmatprep.subr.bf16.mxu0 0
  %523 = vmatpush1.bf16.msra.mxu0 %v387
  %524 = vmatprep.subr.bf16.mxu0 0
  %525 = vmatpush1.bf16.msra.mxu0 %v388
  %526 = vmatprep.subr.bf16.mxu0 0
  %527 = vmatpush1.bf16.msra.mxu0 %v389
  %528 = vmatprep.subr.bf16.mxu0 0
  %529 = vmatpush1.bf16.msra.mxu0 %v390
  %530 = vmatprep.subr.bf16.mxu0 0
  %531 = vmatpush1.bf16.msra.mxu0 %v391
  %532 = vmatprep.subr.bf16.mxu0 0
  %533 = vmatpush1.bf16.msra.mxu0 %v392
  %534 = vmatprep.subr.bf16.mxu0 0
  %535 = vmatpush1.bf16.msra.mxu0 %v393
  %536 = vmatprep.mubr.bf16.mxu0 %v156
  %537 = vmatmul.mubr.bf16.gmra.mrb[0].mxu0 %v155
  %v538 = vpop.f32.mrb[0].mxu0
  %v539 = vadd.f32 %v499, %v538
  %v540 = vpop.f32.mrb[0].mxu0
  %v541 = vpop.f32.mrb[0].mxu0
  %v542 = vpop.f32.mrb[0].mxu0
  %543 = vdwg.mxu0
  %544 = vmatprep.subr.bf16.mxu0 0
  %545 = vmatpush1.bf16.msra.mxu0 %v394
  %546 = vmatprep.subr.bf16.mxu0 0
  %547 = vmatpush1.bf16.msra.mxu0 %v395
  %548 = vmatprep.subr.bf16.mxu0 0
  %549 = vmatpush1.bf16.msra.mxu0 %v396
  %550 = vmatprep.subr.bf16.mxu0 0
  %551 = vmatpush1.bf16.msra.mxu0 %v397
  %552 = vmatprep.subr.bf16.mxu0 0
  %553 = vmatpush1.bf16.msra.mxu0 %v398
  %554 = vmatprep.subr.bf16.mxu0 0
  %555 = vmatpush1.bf16.msra.mxu0 %v399
  %556 = vmatprep.subr.bf16.mxu0 0
  %557 = vmatpush1.bf16.msra.mxu0 %v400
  %558 = vmatprep.subr.bf16.mxu0 0
  %559 = vmatpush1.bf16.msra.mxu0 %v401
  %560 = vmatprep.subr.bf16.mxu0 0
  %561 = vmatpush1.bf16.msra.mxu0 %v402
  %562 = vmatprep.subr.bf16.mxu0 0
  %563 = vmatpush1.bf16.msra.mxu0 %v403
  %564 = vmatprep.subr.bf16.mxu0 0
  %565 = vmatpush1.bf16.msra.mxu0 %v404
  %566 = vmatprep.subr.bf16.mxu0 0
  %567 = vmatpush1.bf16.msra.mxu0 %v405
  %568 = vmatprep.subr.bf16.mxu0 0
  %569 = vmatpush1.bf16.msra.mxu0 %v406
  %570 = vmatprep.subr.bf16.mxu0 0
  %571 = vmatpush1.bf16.msra.mxu0 %v407
  %572 = vmatprep.subr.bf16.mxu0 0
  %573 = vmatpush1.bf16.msra.mxu0 %v408
  %574 = vmatprep.subr.bf16.mxu0 0
  %575 = vmatpush1.bf16.msra.mxu0 %v409
  %576 = vmatprep.mubr.bf16.mxu0 %v158
  %577 = vmatmul.mubr.bf16.gmra.mrb[0].mxu0 %v157
  %v578 = vpop.f32.mrb[0].mxu0
  %v579 = vadd.f32 %v539, %v578
  %v580 = vpop.f32.mrb[0].mxu0
  %v581 = vpop.f32.mrb[0].mxu0
  %v582 = vpop.f32.mrb[0].mxu0
  %583 = vdwg.mxu0
  %584 = vmatprep.subr.bf16.mxu0 0
  %585 = vmatpush1.bf16.msra.mxu0 %v410
  %586 = vmatprep.subr.bf16.mxu0 0
  %587 = vmatpush1.bf16.msra.mxu0 0
  %588 = vmatprep.subr.bf16.mxu0 0
  %589 = vmatpush1.bf16.msra.mxu0 0
  %590 = vmatprep.subr.bf16.mxu0 0
  %591 = vmatpush1.bf16.msra.mxu0 0
  %592 = vmatprep.subr.bf16.mxu0 0
  %593 = vmatpush1.bf16.msra.mxu0 0
  %594 = vmatprep.subr.bf16.mxu0 0
  %595 = vmatpush1.bf16.msra.mxu0 0
  %596 = vmatprep.subr.bf16.mxu0 0
  %597 = vmatpush1.bf16.msra.mxu0 0
  %598 = vmatprep.subr.bf16.mxu0 0
  %599 = vmatpush1.bf16.msra.mxu0 0
  %600 = vmatprep.subr.bf16.mxu0 0
  %601 = vmatpush1.bf16.msra.mxu0 0
  %602 = vmatprep.subr.bf16.mxu0 0
  %603 = vmatpush1.bf16.msra.mxu0 0
  %604 = vmatprep.subr.bf16.mxu0 0
  %605 = vmatpush1.bf16.msra.mxu0 0
  %606 = vmatprep.subr.bf16.mxu0 0
  %607 = vmatpush1.bf16.msra.mxu0 0
  %608 = vmatprep.subr.bf16.mxu0 0
  %609 = vmatpush1.bf16.msra.mxu0 0
  %610 = vmatprep.subr.bf16.mxu0 0
  %611 = vmatpush1.bf16.msra.mxu0 0
  %612 = vmatprep.subr.bf16.mxu0 0
  %613 = vmatpush1.bf16.msra.mxu0 0
  %614 = vmatprep.subr.bf16.mxu0 0
  %615 = vmatpush1.bf16.msra.mxu0 0
  %616 = vmatprep.mubr.bf16.mxu0 0
  %617 = vmatmul.mubr.bf16.gmra.mrb[0].mxu0 %v462
  %v618 = vpop.f32.mrb[0].mxu0
  %v619 = vadd.f32 %v579, %v618
  %v620 = vpop.f32.mrb[0].mxu0
  %v621 = vpop.f32.mrb[0].mxu0
  %v622 = vpop.f32.mrb[0].mxu0
  %623 = vdwg.mxu0
  %v624 = vxor.u32 %v619, 2147483648
  %v625 = vmul.f32 %v624, 1.442695
  %v626 = vpow.pop %v625
  %v627 = vadd.f32 %v626, 1.0
  %v628 = vrcp.pop %v627
  %v629 = vmul.f32 1.0, %v628
  %v630 = vmul.f32 %v629, 0.7853982
  %v631 = vand.u32 2147483647, %v630
  %vm632 = vcmp.le.f32.partialorder %v631, 0.7853982
  %vm633 = vcmp.lt.s32.totalorder %v630, 0
  %v634 = vand.u32 %v630, 2139095040
  %v635 = vshrl.u32 %v634, 23
  %v636 = vsub.s32 %v635, 127
  %v637 = vand.u32 2147483647, %v630
  %v638 = vand.u32 %v637, 8388607
  %v639 = vor.u32 %v638, 8388608
  %v640 = vsub.s32 0, %v639
  %v641 = vadd.s32 %v636, 1
  %vm642 = vcmp.gt.s32.totalorder %v641, 0
  %v643 = vsel %vm642, %v641, 0
  %v644 = vshrl.u32 %v643, 5
  %v645 = vand.u32 %v643, 31
  %v646 = vsub.s32 32, %v645
  %v647 = vshrl.u32 683565275, %v646
  %v648 = vshll.u32 683565275, %v645
  %v649 = vshrl.u32 2475754826, %v646
  %v650 = vor.u32 %v648, %v649
  %v651 = vshll.u32 2475754826, %v645
  %v652 = vshrl.u32 2131351028, %v646
  %v653 = vor.u32 %v651, %v652
  %v654 = vshll.u32 2131351028, %v645
  %v655 = vshrl.u32 2102212464, %v646
  %v656 = vor.u32 %v654, %v655
  %v657 = vshll.u32 2102212464, %v645
  %v658 = vshrl.u32 920167782, %v646
  %v659 = vor.u32 %v657, %v658
  %v660 = vshll.u32 920167782, %v645
  %v661 = vshrl.u32 1326507024, %v646
  %v662 = vor.u32 %v660, %v661
  %vm663 = vcmp.lt.s32.totalorder %v644, 1
  %vm664 = vcmp.lt.s32.totalorder %v644, 2
  %vm665 = vcmp.lt.s32.totalorder %v644, 3
  %vm666 = vcmp.lt.s32.totalorder %v644, 4
  %v667 = vsel %vm663, %v647, %v650
  %v668 = vsel %vm666, %v656, 2102212464
  %v669 = vsel %vm665, %v653, %v668
  %v670 = vsel %vm664, %v667, %v669
  %v671 = vsel %vm663, %v650, %v653
  %v672 = vsel %vm666, %v659, 920167782
  %v673 = vsel %vm665, %v656, %v672
  %v674 = vsel %vm664, %v671, %v673
  %v675 = vsel %vm663, %v653, %v656
  %v676 = vsel %vm666, %v662, 1326507024
  %v677 = vsel %vm665, %v659, %v676
  %v678 = vsel %vm664, %v675, %v677
  %v679 = vshll.u32 %v639, 8
  %v680 = vmul.u32.u64.compose %v679, %v678
  %v681 = vextract.low.u32 %v680
  %v682 = vextract.high.u32 %v680
  %v683 = vmul.u32.u64.compose %v679, %v674
  %v684 = vextract.low.u32 %v683
  %v685 = vextract.high.u32 %v683
  %v686 = vmul.u32 %v679, %v670
  %v687 = vadd.s32 %v682, %v684
  %vm688 = vc.u32 %v682, %v684
  %v689 = vadd.s32 %v685, 1
  %v690 = vsel %vm688, %v689, %v685
  %v691 = vadd.s32 %v686, %v690
  %v692 = vadd.s32 %v691, 536870912
  %v693 = vshrl.u32 %v692, 30
  %v694 = vshll.u32 %v693, 30
  %v695 = vsub.s32 %v691, %v694
  %vm696 = vcmp.lt.s32.totalorder %v695, 0
  %v697 = vsub.s32 0, %v695
  %v698 = vsel %vm696, %v697, %v695
  %v699 = vclz %v698
  %v700 = vsub.s32 %v699, 2
  %vm701 = vcmp.gt.s32.totalorder 0, %v700
  %v702 = vsel %vm701, 0, %v700
  %v703 = vsub.s32 32, %v702
  %v704 = vshll.u32 %v695, %v702
  %v705 = vshrl.u32 %v687, %v703
  %v706 = vor.u32 %v704, %v705
  %v707 = vsub.s32 4294967266, %v702
  %v708 = vadd.s32 %v707, 127
  %v709 = vshll.u32 %v708, 23
  %v710 = vor.u32 4788187, %v709
  %v711 = vand.u32 2147483647, %v710
  %v713 = vcvt.s32.f32 %v706
  %v714 = vmul.f32 %v713, %v711
  %v715 = vxor.u32 %v714, 2147483648
  %v716 = vsel %vm633, %v715, %v714
  %v717 = vsub.s32 4, %v693
  %v718 = vsel %vm633, %v717, %v693
  %v719 = vsel %vm632, %v630, %v716
  %v720 = vsel %vm632, 0, %v718
  %v721 = vcosq.f32.pop %v719
  %v722 = vsinq.f32.pop %v719
  %vm723 = vweird.f32 %v630
  %v724 = vand.u32 %v720, 3
  %vm725 = vcmp.lt.s32.totalorder %v724, 2
  %vm726 = vcmp.eq.s32.totalorder %v724, 0
  %v727 = vxor.u32 %v722, 2147483648
  %v728 = vsel %vm726, %v721, %v727
  %vm729 = vcmp.eq.s32.totalorder %v724, 2
  %v730 = vxor.u32 %v721, 2147483648
  %v731 = vsel %vm729, %v730, %v722
  %v732 = vsel %vm725, %v728, %v731
  %v733 = vsel %vm723, nan, %v732
  %v734 = vand.u32 2147483647, %v630
  %vm735 = vcmp.le.f32.partialorder %v734, 0.7853982
  %vm736 = vcmp.lt.s32.totalorder %v630, 0
  %v737 = vand.u32 %v630, 2139095040
  %v738 = vshrl.u32 %v737, 23
  %v739 = vsub.s32 %v738, 127
  %v740 = vand.u32 2147483647, %v630
  %v741 = vand.u32 %v740, 8388607
  %v742 = vor.u32 %v741, 8388608
  %v743 = vsub.s32 0, %v742
  %v744 = vadd.s32 %v739, 1
  %vm745 = vcmp.gt.s32.totalorder %v744, 0
  %v746 = vsel %vm745, %v744, 0
  %v747 = vshrl.u32 %v746, 5
  %v748 = vand.u32 %v746, 31
  %v749 = vsub.s32 32, %v748
  %v750 = vshrl.u32 683565275, %v749
  %v751 = vshll.u32 683565275, %v748
  %v752 = vshrl.u32 2475754826, %v749
  %v753 = vor.u32 %v751, %v752
  %v754 = vshll.u32 2475754826, %v748
  %v755 = vshrl.u32 2131351028, %v749
  %v756 = vor.u32 %v754, %v755
  %v757 = vshll.u32 2131351028, %v748
  %v758 = vshrl.u32 2102212464, %v749
  %v759 = vor.u32 %v757, %v758
  %v760 = vshll.u32 2102212464, %v748
  %v761 = vshrl.u32 920167782, %v749
  %v762 = vor.u32 %v760, %v761
  %v763 = vshll.u32 920167782, %v748
  %v764 = vshrl.u32 1326507024, %v749
  %v765 = vor.u32 %v763, %v764
  %vm766 = vcmp.lt.s32.totalorder %v747, 1
  %vm767 = vcmp.lt.s32.totalorder %v747, 2
  %vm768 = vcmp.lt.s32.totalorder %v747, 3
  %vm769 = vcmp.lt.s32.totalorder %v747, 4
  %v770 = vsel %vm766, %v750, %v753
  %v771 = vsel %vm769, %v759, 2102212464
  %v772 = vsel %vm768, %v756, %v771
  %v773 = vsel %vm767, %v770, %v772
  %v774 = vsel %vm766, %v753, %v756
  %v775 = vsel %vm769, %v762, 920167782
  %v776 = vsel %vm768, %v759, %v775
  %v777 = vsel %vm767, %v774, %v776
  %v778 = vsel %vm766, %v756, %v759
  %v779 = vsel %vm769, %v765, 1326507024
  %v780 = vsel %vm768, %v762, %v779
  %v781 = vsel %vm767, %v778, %v780
  %v782 = vshll.u32 %v742, 8
  %v783 = vmul.u32.u64.compose %v782, %v781
  %v784 = vextract.low.u32 %v783
  %v785 = vextract.high.u32 %v783
  %v786 = vmul.u32.u64.compose %v782, %v777
  %v787 = vextract.low.u32 %v786
  %v788 = vextract.high.u32 %v786
  %v789 = vmul.u32 %v782, %v773
  %v790 = vadd.s32 %v785, %v787
  %vm791 = vc.u32 %v785, %v787
  %v792 = vadd.s32 %v788, 1
  %v793 = vsel %vm791, %v792, %v788
  %v794 = vadd.s32 %v789, %v793
  %v795 = vadd.s32 %v794, 536870912
  %v796 = vshrl.u32 %v795, 30
  %v797 = vshll.u32 %v796, 30
  %v798 = vsub.s32 %v794, %v797
  %vm799 = vcmp.lt.s32.totalorder %v798, 0
  %v800 = vsub.s32 0, %v798
  %v801 = vsel %vm799, %v800, %v798
  %v802 = vclz %v801
  %v803 = vsub.s32 %v802, 2
  %vm804 = vcmp.gt.s32.totalorder 0, %v803
  %v805 = vsel %vm804, 0, %v803
  %v806 = vsub.s32 32, %v805
  %v807 = vshll.u32 %v798, %v805
  %v808 = vshrl.u32 %v790, %v806
  %v809 = vor.u32 %v807, %v808
  %v810 = vsub.s32 4294967266, %v805
  %v811 = vadd.s32 %v810, 127
  %v812 = vshll.u32 %v811, 23
  %v813 = vor.u32 4788187, %v812
  %v814 = vand.u32 2147483647, %v813
  %v816 = vcvt.s32.f32 %v809
  %v817 = vmul.f32 %v816, %v814
  %v818 = vxor.u32 %v817, 2147483648
  %v819 = vsel %vm736, %v818, %v817
  %v820 = vsub.s32 4, %v796
  %v821 = vsel %vm736, %v820, %v796
  %v822 = vsel %vm735, %v630, %v819
  %v823 = vsel %vm735, 0, %v821
  %v824 = vcosq.f32.pop %v822
  %v825 = vsinq.f32.pop %v822
  %vm826 = vweird.f32 %v630
  %v827 = vadd.s32 %v823, 3
  %v828 = vand.u32 %v827, 3
  %vm829 = vcmp.lt.s32.totalorder %v828, 2
  %vm830 = vcmp.eq.s32.totalorder %v828, 0
  %v831 = vxor.u32 %v825, 2147483648
  %v832 = vsel %vm830, %v824, %v831
  %vm833 = vcmp.eq.s32.totalorder %v828, 2
  %v834 = vxor.u32 %v824, 2147483648
  %v835 = vsel %vm833, %v834, %v825
  %v836 = vsel %vm829, %v832, %v835
  %v837 = vsel %vm826, nan, %v836
  %v838 = vsub.f32 %v837, %v733
  %v839 = vld [vmem:[%s3] sm:$0xf]
  %v840 = vlaneseq
  %v841 = vshrl.u32 %v840, 7
  %v842 = vsub.s32 0, %v841
  %v843 = vrot.slane %v839, %v842
  %845 = vset.pattern.permute.xlu0 0
  %846 = vperm.xlu0 %845, %v838
  %v847 = vpop.permute.xlu0 %846
  %v849 = vmul.f32 %v843, %v847
  %851 = vset.pattern.permute.xlu0 0
  %852 = vperm.xlu0 %851, %v733
  %v853 = vpop.permute.xlu0 %852
  %v855 = vadd.f32 %v853, %v849
  %856 = vset.pattern.permute.xlu0 4
  %857 = vperm.xlu0 %856, %v838
  %v858 = vpop.permute.xlu0 %857
  %v860 = vmul.f32 %v843, %v858
  %861 = vset.pattern.permute.xlu0 4
  %862 = vperm.xlu0 %861, %v733
  %v863 = vpop.permute.xlu0 %862
  %v865 = vadd.f32 %v863, %v860
  %v866 = vlaneseq
  %v867 = vshrl.u32 %v866, 7
  %v868 = vsub.s32 1, %v867
  %v869 = vrot.slane %v839, %v868
  %870 = vset.pattern.permute.xlu0 1
  %871 = vperm.xlu0 %870, %v838
  %v872 = vpop.permute.xlu0 %871
  %v874 = vmul.f32 %v869, %v872
  %875 = vset.pattern.permute.xlu0 1
  %876 = vperm.xlu0 %875, %v733
  %v877 = vpop.permute.xlu0 %876
  %v879 = vadd.f32 %v877, %v874
  %v880 = vmul.f32 %v855, %v879
  %881 = vset.pattern.permute.xlu0 5
  %882 = vperm.xlu0 %881, %v838
  %v883 = vpop.permute.xlu0 %882
  %v885 = vmul.f32 %v869, %v883
  %886 = vset.pattern.permute.xlu0 5
  %887 = vperm.xlu0 %886, %v733
  %v888 = vpop.permute.xlu0 %887
  %v890 = vadd.f32 %v888, %v885
  %v891 = vmul.f32 %v865, %v890
  %v892 = vlaneseq
  %v893 = vshrl.u32 %v892, 7
  %v894 = vsub.s32 2, %v893
  %v895 = vrot.slane %v839, %v894
  %896 = vset.pattern.permute.xlu0 2
  %897 = vperm.xlu0 %896, %v838
  %v898 = vpop.permute.xlu0 %897
  %v900 = vmul.f32 %v895, %v898
  %901 = vset.pattern.permute.xlu0 2
  %902 = vperm.xlu0 %901, %v733
  %v903 = vpop.permute.xlu0 %902
  %v905 = vadd.f32 %v903, %v900
  %v906 = vmul.f32 %v880, %v905
  %907 = vset.pattern.permute.xlu0 6
  %908 = vperm.xlu0 %907, %v838
  %v909 = vpop.permute.xlu0 %908
  %v911 = vmul.f32 %v895, %v909
  %912 = vset.pattern.permute.xlu0 6
  %913 = vperm.xlu0 %912, %v733
  %v914 = vpop.permute.xlu0 %913
  %v916 = vadd.f32 %v914, %v911
  %v917 = vmul.f32 %v891, %v916
  %v918 = vlaneseq
  %v919 = vshrl.u32 %v918, 7
  %v920 = vsub.s32 3, %v919
  %v921 = vrot.slane %v839, %v920
  %922 = vset.pattern.permute.xlu0 3
  %923 = vperm.xlu0 %922, %v838
  %v924 = vpop.permute.xlu0 %923
  %v926 = vmul.f32 %v921, %v924
  %927 = vset.pattern.permute.xlu0 3
  %928 = vperm.xlu0 %927, %v733
  %v929 = vpop.permute.xlu0 %928
  %v931 = vadd.f32 %v929, %v926
  %v932 = vmul.f32 %v906, %v931
  %933 = vset.pattern.permute.xlu0 7
  %934 = vperm.xlu0 %933, %v838
  %v935 = vpop.permute.xlu0 %934
  %v937 = vmul.f32 %v921, %v935
  %938 = vset.pattern.permute.xlu0 7
  %939 = vperm.xlu0 %938, %v733
  %v940 = vpop.permute.xlu0 %939
  %v942 = vadd.f32 %v940, %v937
  %v943 = vmul.f32 %v917, %v942
  %v944 = vpack.c.bf16 %v932, %v932
  %v945 = vld [vmem:[%s4] sm:$0xff]
  %v946 = vld [vmem:[%s4 + $0x8] sm:$0xff]
  %v949 = vunpack.c.l.b16 %v945
  %v950 = vunpack.c.h.b16 %v945
  %v951 = vunpack.c.l.b16 %v946
  %v952 = vunpack.c.h.b16 %v946
  %v953 = vpack.c.b16 %v951, %v949
  %v954 = vpack.c.b16 %v952, %v950
  %v958 = vsel %vm460, %v944, 0
  %960 = vmatprep.subr.bf16.mxu0 %v954
  %961 = vmatpush1.bf16.msra.mxu0 %v953
  %962 = vmatprep.subr.bf16.mxu0 0
  %963 = vmatpush1.bf16.msra.mxu0 0
  %964 = vmatprep.subr.bf16.mxu0 0
  %965 = vmatpush1.bf16.msra.mxu0 0
  %966 = vmatprep.subr.bf16.mxu0 0
  %967 = vmatpush1.bf16.msra.mxu0 0
  %968 = vmatprep.subr.bf16.mxu0 0
  %969 = vmatpush1.bf16.msra.mxu0 0
  %970 = vmatprep.subr.bf16.mxu0 0
  %971 = vmatpush1.bf16.msra.mxu0 0
  %972 = vmatprep.subr.bf16.mxu0 0
  %973 = vmatpush1.bf16.msra.mxu0 0
  %974 = vmatprep.subr.bf16.mxu0 0
  %975 = vmatpush1.bf16.msra.mxu0 0
  %976 = vmatprep.subr.bf16.mxu0 0
  %977 = vmatpush1.bf16.msra.mxu0 0
  %978 = vmatprep.subr.bf16.mxu0 0
  %979 = vmatpush1.bf16.msra.mxu0 0
  %980 = vmatprep.subr.bf16.mxu0 0
  %981 = vmatpush1.bf16.msra.mxu0 0
  %982 = vmatprep.subr.bf16.mxu0 0
  %983 = vmatpush1.bf16.msra.mxu0 0
  %984 = vmatprep.subr.bf16.mxu0 0
  %985 = vmatpush1.bf16.msra.mxu0 0
  %986 = vmatprep.subr.bf16.mxu0 0
  %987 = vmatpush1.bf16.msra.mxu0 0
  %988 = vmatprep.subr.bf16.mxu0 0
  %989 = vmatpush1.bf16.msra.mxu0 0
  %990 = vmatprep.subr.bf16.mxu0 0
  %991 = vmatpush1.bf16.msra.mxu0 0
  %992 = vmatprep.mubr.bf16.mxu0 0
  %993 = vmatmul.mubr.bf16.gmra.mrb[0].mxu0 %v958
  %v994 = vpop.f32.mrb[0].mxu0
  %v995 = vadd.f32 0.0, %v994
  %v996 = vpop.f32.mrb[0].mxu0
  %v997 = vadd.f32 0.0, %v996
  %v998 = vpop.f32.mrb[0].mxu0
  %v999 = vpop.f32.mrb[0].mxu0
  %1000 = vdwg.mxu0
  %v1001 = vpack.c.bf16 %v943, %v943
  %v1002 = vld [vmem:[%s5] sm:$0xff]
  %v1003 = vld [vmem:[%s5 + $0x8] sm:$0xff]
  %v1006 = vunpack.c.l.b16 %v1002
  %v1007 = vunpack.c.h.b16 %v1002
  %v1008 = vunpack.c.l.b16 %v1003
  %v1009 = vunpack.c.h.b16 %v1003
  %v1010 = vpack.c.b16 %v1008, %v1006
  %v1011 = vpack.c.b16 %v1009, %v1007
  %v1015 = vsel %vm460, %v1001, 0
  %1017 = vmatprep.subr.bf16.mxu0 %v1011
  %1018 = vmatpush1.bf16.msra.mxu0 %v1010
  %1019 = vmatprep.subr.bf16.mxu0 0
  %1020 = vmatpush1.bf16.msra.mxu0 0
  %1021 = vmatprep.subr.bf16.mxu0 0
  %1022 = vmatpush1.bf16.msra.mxu0 0
  %1023 = vmatprep.subr.bf16.mxu0 0
  %1024 = vmatpush1.bf16.msra.mxu0 0
  %1025 = vmatprep.subr.bf16.mxu0 0
  %1026 = vmatpush1.bf16.msra.mxu0 0
  %1027 = vmatprep.subr.bf16.mxu0 0
  %1028 = vmatpush1.bf16.msra.mxu0 0
  %1029 = vmatprep.subr.bf16.mxu0 0
  %1030 = vmatpush1.bf16.msra.mxu0 0
  %1031 = vmatprep.subr.bf16.mxu0 0
  %1032 = vmatpush1.bf16.msra.mxu0 0
  %1033 = vmatprep.subr.bf16.mxu0 0
  %1034 = vmatpush1.bf16.msra.mxu0 0
  %1035 = vmatprep.subr.bf16.mxu0 0
  %1036 = vmatpush1.bf16.msra.mxu0 0
  %1037 = vmatprep.subr.bf16.mxu0 0
  %1038 = vmatpush1.bf16.msra.mxu0 0
  %1039 = vmatprep.subr.bf16.mxu0 0
  %1040 = vmatpush1.bf16.msra.mxu0 0
  %1041 = vmatprep.subr.bf16.mxu0 0
  %1042 = vmatpush1.bf16.msra.mxu0 0
  %1043 = vmatprep.subr.bf16.mxu0 0
  %1044 = vmatpush1.bf16.msra.mxu0 0
  %1045 = vmatprep.subr.bf16.mxu0 0
  %1046 = vmatpush1.bf16.msra.mxu0 0
  %1047 = vmatprep.subr.bf16.mxu0 0
  %1048 = vmatpush1.bf16.msra.mxu0 0
  %1049 = vmatprep.mubr.bf16.mxu0 0
  %1050 = vmatmul.mubr.bf16.gmra.mrb[0].mxu0 %v1015
  %v1051 = vpop.f32.mrb[0].mxu0
  %v1052 = vadd.f32 0.0, %v1051
  %v1053 = vpop.f32.mrb[0].mxu0
  %v1054 = vadd.f32 0.0, %v1053
  %v1055 = vpop.f32.mrb[0].mxu0
  %v1056 = vpop.f32.mrb[0].mxu0
  %1057 = vdwg.mxu0
  %v1058 = vmul.f32 %v995, %v1052
  %v1059 = vmul.f32 %v997, %v1054
  %v1060 = vpack.c.bf16 %v1058, %v1058
  %v1061 = vpack.c.bf16 %v1059, %v1059
  %v1062 = vld [vmem:[%s6] sm:$0xff]
  %v1063 = vld [vmem:[%s6 + $0x8] sm:$0xff]
  %v1064 = vld [vmem:[%s6 + $0x10] sm:$0xff]
  %v1065 = vld [vmem:[%s6 + $0x18] sm:$0xff]
  %v1066 = vld [vmem:[%s6 + $0x20] sm:$0xff]
  %v1067 = vld [vmem:[%s6 + $0x28] sm:$0xff]
  %v1068 = vld [vmem:[%s6 + $0x30] sm:$0xff]
  %v1069 = vld [vmem:[%s6 + $0x38] sm:$0xff]
  %v1070 = vld [vmem:[%s6 + $0x40] sm:$0xff]
  %v1071 = vld [vmem:[%s6 + $0x48] sm:$0xff]
  %v1072 = vld [vmem:[%s6 + $0x50] sm:$0xff]
  %v1073 = vld [vmem:[%s6 + $0x58] sm:$0xff]
  %v1074 = vld [vmem:[%s6 + $0x60] sm:$0xff]
  %v1075 = vld [vmem:[%s6 + $0x68] sm:$0xff]
  %v1076 = vld [vmem:[%s6 + $0x70] sm:$0xff]
  %v1077 = vld [vmem:[%s6 + $0x78] sm:$0xff]
  %v1078 = vld [vmem:[%s6 + $0x80] sm:$0xff]
  %v1079 = vld [vmem:[%s6 + $0x88] sm:$0xff]
  %v1080 = vld [vmem:[%s6 + $0x90] sm:$0xff]
  %v1081 = vld [vmem:[%s6 + $0x98] sm:$0xff]
  %v1082 = vld [vmem:[%s6 + $0xa0] sm:$0xff]
  %v1083 = vld [vmem:[%s6 + $0xa8] sm:$0xff]
  %v1084 = vld [vmem:[%s6 + $0xb0] sm:$0xff]
  %v1085 = vld [vmem:[%s6 + $0xb8] sm:$0xff]
  %v1086 = vld [vmem:[%s6 + $0xc0] sm:$0xff]
  %v1087 = vld [vmem:[%s6 + $0xc8] sm:$0xff]
  %v1088 = vld [vmem:[%s6 + $0xd0] sm:$0xff]
  %v1089 = vld [vmem:[%s6 + $0xd8] sm:$0xff]
  %v1090 = vld [vmem:[%s6 + $0xe0] sm:$0xff]
  %v1091 = vld [vmem:[%s6 + $0xe8] sm:$0xff]
  %v1092 = vld [vmem:[%s6 + $0xf0] sm:$0xff]
  %v1093 = vld [vmem:[%s6 + $0xf8] sm:$0xff]
  %v1094 = vld [vmem:[%s6 + $0x100] sm:$0xff]
  %v1095 = vld [vmem:[%s6 + $0x108] sm:$0xff]
  %v1096 = vld [vmem:[%s6 + $0x110] sm:$0xff]
  %v1097 = vld [vmem:[%s6 + $0x118] sm:$0xff]
  %v1098 = vld [vmem:[%s6 + $0x120] sm:$0xff]
  %v1099 = vld [vmem:[%s6 + $0x128] sm:$0xff]
  %v1100 = vld [vmem:[%s6 + $0x130] sm:$0xff]
  %v1101 = vld [vmem:[%s6 + $0x138] sm:$0xff]
  %v1102 = vld [vmem:[%s6 + $0x140] sm:$0xff]
  %v1103 = vld [vmem:[%s6 + $0x148] sm:$0xff]
  %v1104 = vld [vmem:[%s6 + $0x150] sm:$0xff]
  %v1105 = vld [vmem:[%s6 + $0x158] sm:$0xff]
  %v1106 = vld [vmem:[%s6 + $0x160] sm:$0xff]
  %v1107 = vld [vmem:[%s6 + $0x168] sm:$0xff]
  %v1108 = vld [vmem:[%s6 + $0x170] sm:$0xff]
  %v1109 = vld [vmem:[%s6 + $0x178] sm:$0xff]
  %v1110 = vld [vmem:[%s6 + $0x180] sm:$0xff]
  %v1111 = vld [vmem:[%s6 + $0x188] sm:$0xff]
  %v1112 = vld [vmem:[%s6 + $0x190] sm:$0xff]
  %v1113 = vld [vmem:[%s6 + $0x198] sm:$0xff]
  %v1114 = vld [vmem:[%s6 + $0x1a0] sm:$0xff]
  %v1115 = vld [vmem:[%s6 + $0x1a8] sm:$0xff]
  %v1116 = vld [vmem:[%s6 + $0x1b0] sm:$0xff]
  %v1117 = vld [vmem:[%s6 + $0x1b8] sm:$0xff]
  %v1118 = vld [vmem:[%s6 + $0x1c0] sm:$0xff]
  %v1119 = vld [vmem:[%s6 + $0x1c8] sm:$0xff]
  %v1120 = vld [vmem:[%s6 + $0x1d0] sm:$0xff]
  %v1121 = vld [vmem:[%s6 + $0x1d8] sm:$0xff]
  %v1122 = vld [vmem:[%s6 + $0x1e0] sm:$0xff]
  %v1123 = vld [vmem:[%s6 + $0x1e8] sm:$0xff]
  %v1124 = vld [vmem:[%s6 + $0x1f0] sm:$0xff]
  %v1125 = vld [vmem:[%s6 + $0x1f8] sm:$0xff]
  %v1190 = vunpack.c.l.b16 %v1062
  %v1191 = vunpack.c.h.b16 %v1062
  %v1192 = vunpack.c.l.b16 %v1063
  %v1193 = vunpack.c.h.b16 %v1063
  %v1194 = vunpack.c.l.b16 %v1064
  %v1195 = vunpack.c.h.b16 %v1064
  %v1196 = vunpack.c.l.b16 %v1065
  %v1197 = vunpack.c.h.b16 %v1065
  %v1198 = vunpack.c.l.b16 %v1066
  %v1199 = vunpack.c.h.b16 %v1066
  %v1200 = vunpack.c.l.b16 %v1067
  %v1201 = vunpack.c.h.b16 %v1067
  %v1202 = vunpack.c.l.b16 %v1068
  %v1203 = vunpack.c.h.b16 %v1068
  %v1204 = vunpack.c.l.b16 %v1069
  %v1205 = vunpack.c.h.b16 %v1069
  %v1206 = vunpack.c.l.b16 %v1070
  %v1207 = vunpack.c.h.b16 %v1070
  %v1208 = vunpack.c.l.b16 %v1071
  %v1209 = vunpack.c.h.b16 %v1071
  %v1210 = vunpack.c.l.b16 %v1072
  %v1211 = vunpack.c.h.b16 %v1072
  %v1212 = vunpack.c.l.b16 %v1073
  %v1213 = vunpack.c.h.b16 %v1073
  %v1214 = vunpack.c.l.b16 %v1074
  %v1215 = vunpack.c.h.b16 %v1074
  %v1216 = vunpack.c.l.b16 %v1075
  %v1217 = vunpack.c.h.b16 %v1075
  %v1218 = vunpack.c.l.b16 %v1076
  %v1219 = vunpack.c.h.b16 %v1076
  %v1220 = vunpack.c.l.b16 %v1077
  %v1221 = vunpack.c.h.b16 %v1077
  %v1222 = vunpack.c.l.b16 %v1078
  %v1223 = vunpack.c.h.b16 %v1078
  %v1224 = vunpack.c.l.b16 %v1079
  %v1225 = vunpack.c.h.b16 %v1079
  %v1226 = vunpack.c.l.b16 %v1080
  %v1227 = vunpack.c.h.b16 %v1080
  %v1228 = vunpack.c.l.b16 %v1081
  %v1229 = vunpack.c.h.b16 %v1081
  %v1230 = vunpack.c.l.b16 %v1082
  %v1231 = vunpack.c.h.b16 %v1082
  %v1232 = vunpack.c.l.b16 %v1083
  %v1233 = vunpack.c.h.b16 %v1083
  %v1234 = vunpack.c.l.b16 %v1084
  %v1235 = vunpack.c.h.b16 %v1084
  %v1236 = vunpack.c.l.b16 %v1085
  %v1237 = vunpack.c.h.b16 %v1085
  %v1238 = vunpack.c.l.b16 %v1086
  %v1239 = vunpack.c.h.b16 %v1086
  %v1240 = vunpack.c.l.b16 %v1087
  %v1241 = vunpack.c.h.b16 %v1087
  %v1242 = vunpack.c.l.b16 %v1088
  %v1243 = vunpack.c.h.b16 %v1088
  %v1244 = vunpack.c.l.b16 %v1089
  %v1245 = vunpack.c.h.b16 %v1089
  %v1246 = vunpack.c.l.b16 %v1090
  %v1247 = vunpack.c.h.b16 %v1090
  %v1248 = vunpack.c.l.b16 %v1091
  %v1249 = vunpack.c.h.b16 %v1091
  %v1250 = vunpack.c.l.b16 %v1092
  %v1251 = vunpack.c.h.b16 %v1092
  %v1252 = vunpack.c.l.b16 %v1093
  %v1253 = vunpack.c.h.b16 %v1093
  %v1254 = vunpack.c.l.b16 %v1094
  %v1255 = vunpack.c.h.b16 %v1094
  %v1256 = vunpack.c.l.b16 %v1095
  %v1257 = vunpack.c.h.b16 %v1095
  %v1258 = vunpack.c.l.b16 %v1096
  %v1259 = vunpack.c.h.b16 %v1096
  %v1260 = vunpack.c.l.b16 %v1097
  %v1261 = vunpack.c.h.b16 %v1097
  %v1262 = vunpack.c.l.b16 %v1098
  %v1263 = vunpack.c.h.b16 %v1098
  %v1264 = vunpack.c.l.b16 %v1099
  %v1265 = vunpack.c.h.b16 %v1099
  %v1266 = vunpack.c.l.b16 %v1100
  %v1267 = vunpack.c.h.b16 %v1100
  %v1268 = vunpack.c.l.b16 %v1101
  %v1269 = vunpack.c.h.b16 %v1101
  %v1270 = vunpack.c.l.b16 %v1102
  %v1271 = vunpack.c.h.b16 %v1102
  %v1272 = vunpack.c.l.b16 %v1103
  %v1273 = vunpack.c.h.b16 %v1103
  %v1274 = vunpack.c.l.b16 %v1104
  %v1275 = vunpack.c.h.b16 %v1104
  %v1276 = vunpack.c.l.b16 %v1105
  %v1277 = vunpack.c.h.b16 %v1105
  %v1278 = vunpack.c.l.b16 %v1106
  %v1279 = vunpack.c.h.b16 %v1106
  %v1280 = vunpack.c.l.b16 %v1107
  %v1281 = vunpack.c.h.b16 %v1107
  %v1282 = vunpack.c.l.b16 %v1108
  %v1283 = vunpack.c.h.b16 %v1108
  %v1284 = vunpack.c.l.b16 %v1109
  %v1285 = vunpack.c.h.b16 %v1109
  %v1286 = vunpack.c.l.b16 %v1110
  %v1287 = vunpack.c.h.b16 %v1110
  %v1288 = vunpack.c.l.b16 %v1111
  %v1289 = vunpack.c.h.b16 %v1111
  %v1290 = vunpack.c.l.b16 %v1112
  %v1291 = vunpack.c.h.b16 %v1112
  %v1292 = vunpack.c.l.b16 %v1113
  %v1293 = vunpack.c.h.b16 %v1113
  %v1294 = vunpack.c.l.b16 %v1114
  %v1295 = vunpack.c.h.b16 %v1114
  %v1296 = vunpack.c.l.b16 %v1115
  %v1297 = vunpack.c.h.b16 %v1115
  %v1298 = vunpack.c.l.b16 %v1116
  %v1299 = vunpack.c.h.b16 %v1116
  %v1300 = vunpack.c.l.b16 %v1117
  %v1301 = vunpack.c.h.b16 %v1117
  %v1302 = vunpack.c.l.b16 %v1118
  %v1303 = vunpack.c.h.b16 %v1118
  %v1304 = vunpack.c.l.b16 %v1119
  %v1305 = vunpack.c.h.b16 %v1119
  %v1306 = vunpack.c.l.b16 %v1120
  %v1307 = vunpack.c.h.b16 %v1120
  %v1308 = vunpack.c.l.b16 %v1121
  %v1309 = vunpack.c.h.b16 %v1121
  %v1310 = vunpack.c.l.b16 %v1122
  %v1311 = vunpack.c.h.b16 %v1122
  %v1312 = vunpack.c.l.b16 %v1123
  %v1313 = vunpack.c.h.b16 %v1123
  %v1314 = vunpack.c.l.b16 %v1124
  %v1315 = vunpack.c.h.b16 %v1124
  %v1316 = vunpack.c.l.b16 %v1125
  %v1317 = vunpack.c.h.b16 %v1125
  %v1318 = vpack.c.b16 %v1194, %v1190
  %v1319 = vpack.c.b16 %v1195, %v1191
  %v1320 = vpack.c.b16 %v1196, %v1192
  %v1321 = vpack.c.b16 %v1197, %v1193
  %v1322 = vpack.c.b16 %v1202, %v1198
  %v1323 = vpack.c.b16 %v1203, %v1199
  %v1324 = vpack.c.b16 %v1204, %v1200
  %v1325 = vpack.c.b16 %v1205, %v1201
  %v1326 = vpack.c.b16 %v1210, %v1206
  %v1327 = vpack.c.b16 %v1211, %v1207
  %v1328 = vpack.c.b16 %v1212, %v1208
  %v1329 = vpack.c.b16 %v1213, %v1209
  %v1330 = vpack.c.b16 %v1218, %v1214
  %v1331 = vpack.c.b16 %v1219, %v1215
  %v1332 = vpack.c.b16 %v1220, %v1216
  %v1333 = vpack.c.b16 %v1221, %v1217
  %v1334 = vpack.c.b16 %v1226, %v1222
  %v1335 = vpack.c.b16 %v1227, %v1223
  %v1336 = vpack.c.b16 %v1228, %v1224
  %v1337 = vpack.c.b16 %v1229, %v1225
  %v1338 = vpack.c.b16 %v1234, %v1230
  %v1339 = vpack.c.b16 %v1235, %v1231
  %v1340 = vpack.c.b16 %v1236, %v1232
  %v1341 = vpack.c.b16 %v1237, %v1233
  %v1342 = vpack.c.b16 %v1242, %v1238
  %v1343 = vpack.c.b16 %v1243, %v1239
  %v1344 = vpack.c.b16 %v1244, %v1240
  %v1345 = vpack.c.b16 %v1245, %v1241
  %v1346 = vpack.c.b16 %v1250, %v1246
  %v1347 = vpack.c.b16 %v1251, %v1247
  %v1348 = vpack.c.b16 %v1252, %v1248
  %v1349 = vpack.c.b16 %v1253, %v1249
  %v1350 = vpack.c.b16 %v1258, %v1254
  %v1351 = vpack.c.b16 %v1259, %v1255
  %v1352 = vpack.c.b16 %v1260, %v1256
  %v1353 = vpack.c.b16 %v1261, %v1257
  %v1354 = vpack.c.b16 %v1266, %v1262
  %v1355 = vpack.c.b16 %v1267, %v1263
  %v1356 = vpack.c.b16 %v1268, %v1264
  %v1357 = vpack.c.b16 %v1269, %v1265
  %v1358 = vpack.c.b16 %v1274, %v1270
  %v1359 = vpack.c.b16 %v1275, %v1271
  %v1360 = vpack.c.b16 %v1276, %v1272
  %v1361 = vpack.c.b16 %v1277, %v1273
  %v1362 = vpack.c.b16 %v1282, %v1278
  %v1363 = vpack.c.b16 %v1283, %v1279
  %v1364 = vpack.c.b16 %v1284, %v1280
  %v1365 = vpack.c.b16 %v1285, %v1281
  %v1366 = vpack.c.b16 %v1290, %v1286
  %v1367 = vpack.c.b16 %v1291, %v1287
  %v1368 = vpack.c.b16 %v1292, %v1288
  %v1369 = vpack.c.b16 %v1293, %v1289
  %v1370 = vpack.c.b16 %v1298, %v1294
  %v1371 = vpack.c.b16 %v1299, %v1295
  %v1372 = vpack.c.b16 %v1300, %v1296
  %v1373 = vpack.c.b16 %v1301, %v1297
  %v1374 = vpack.c.b16 %v1306, %v1302
  %v1375 = vpack.c.b16 %v1307, %v1303
  %v1376 = vpack.c.b16 %v1308, %v1304
  %v1377 = vpack.c.b16 %v1309, %v1305
  %v1378 = vpack.c.b16 %v1314, %v1310
  %v1379 = vpack.c.b16 %v1315, %v1311
  %v1380 = vpack.c.b16 %v1316, %v1312
  %v1381 = vpack.c.b16 %v1317, %v1313
  %1446 = vmatprep.subr.bf16.mxu0 %v1319
  %1447 = vmatpush1.bf16.msra.mxu0 %v1318
  %1448 = vmatprep.subr.bf16.mxu0 %v1323
  %1449 = vmatpush1.bf16.msra.mxu0 %v1322
  %1450 = vmatprep.subr.bf16.mxu0 %v1327
  %1451 = vmatpush1.bf16.msra.mxu0 %v1326
  %1452 = vmatprep.subr.bf16.mxu0 %v1331
  %1453 = vmatpush1.bf16.msra.mxu0 %v1330
  %1454 = vmatprep.subr.bf16.mxu0 %v1335
  %1455 = vmatpush1.bf16.msra.mxu0 %v1334
  %1456 = vmatprep.subr.bf16.mxu0 %v1339
  %1457 = vmatpush1.bf16.msra.mxu0 %v1338
  %1458 = vmatprep.subr.bf16.mxu0 %v1343
  %1459 = vmatpush1.bf16.msra.mxu0 %v1342
  %1460 = vmatprep.subr.bf16.mxu0 %v1347
  %1461 = vmatpush1.bf16.msra.mxu0 %v1346
  %1462 = vmatprep.subr.bf16.mxu0 %v1351
  %1463 = vmatpush1.bf16.msra.mxu0 %v1350
  %1464 = vmatprep.subr.bf16.mxu0 %v1355
  %1465 = vmatpush1.bf16.msra.mxu0 %v1354
  %1466 = vmatprep.subr.bf16.mxu0 %v1359
  %1467 = vmatpush1.bf16.msra.mxu0 %v1358
  %1468 = vmatprep.subr.bf16.mxu0 %v1363
  %1469 = vmatpush1.bf16.msra.mxu0 %v1362
  %1470 = vmatprep.subr.bf16.mxu0 %v1367
  %1471 = vmatpush1.bf16.msra.mxu0 %v1366
  %1472 = vmatprep.subr.bf16.mxu0 %v1371
  %1473 = vmatpush1.bf16.msra.mxu0 %v1370
  %1474 = vmatprep.subr.bf16.mxu0 %v1375
  %1475 = vmatpush1.bf16.msra.mxu0 %v1374
  %1476 = vmatprep.subr.bf16.mxu0 %v1379
  %1477 = vmatpush1.bf16.msra.mxu0 %v1378
  %1478 = vmatprep.mubr.bf16.mxu0 %v1061
  %1479 = vmatmul.mubr.bf16.gmra.mrb[0].mxu0 %v1060
  %v1480 = vpop.f32.mrb[0].mxu0
  %v1481 = vadd.f32 0.0, %v1480
  %v1482 = vpop.f32.mrb[0].mxu0
  %v1483 = vadd.f32 0.0, %v1482
  %v1484 = vpop.f32.mrb[0].mxu0
  %v1485 = vpop.f32.mrb[0].mxu0
  %1486 = vdwg.mxu0
  %1487 = vmatprep.subr.bf16.mxu0 %v1321
  %1488 = vmatpush1.bf16.msra.mxu0 %v1320
  %1489 = vmatprep.subr.bf16.mxu0 %v1325
  %1490 = vmatpush1.bf16.msra.mxu0 %v1324
  %1491 = vmatprep.subr.bf16.mxu0 %v1329
  %1492 = vmatpush1.bf16.msra.mxu0 %v1328
  %1493 = vmatprep.subr.bf16.mxu0 %v1333
  %1494 = vmatpush1.bf16.msra.mxu0 %v1332
  %1495 = vmatprep.subr.bf16.mxu0 %v1337
  %1496 = vmatpush1.bf16.msra.mxu0 %v1336
  %1497 = vmatprep.subr.bf16.mxu0 %v1341
  %1498 = vmatpush1.bf16.msra.mxu0 %v1340
  %1499 = vmatprep.subr.bf16.mxu0 %v1345
  %1500 = vmatpush1.bf16.msra.mxu0 %v1344
  %1501 = vmatprep.subr.bf16.mxu0 %v1349
  %1502 = vmatpush1.bf16.msra.mxu0 %v1348
  %1503 = vmatprep.subr.bf16.mxu0 %v1353
  %1504 = vmatpush1.bf16.msra.mxu0 %v1352
  %1505 = vmatprep.subr.bf16.mxu0 %v1357
  %1506 = vmatpush1.bf16.msra.mxu0 %v1356
  %1507 = vmatprep.subr.bf16.mxu0 %v1361
  %1508 = vmatpush1.bf16.msra.mxu0 %v1360
  %1509 = vmatprep.subr.bf16.mxu0 %v1365
  %1510 = vmatpush1.bf16.msra.mxu0 %v1364
  %1511 = vmatprep.subr.bf16.mxu0 %v1369
  %1512 = vmatpush1.bf16.msra.mxu0 %v1368
  %1513 = vmatprep.subr.bf16.mxu0 %v1373
  %1514 = vmatpush1.bf16.msra.mxu0 %v1372
  %1515 = vmatprep.subr.bf16.mxu0 %v1377
  %1516 = vmatpush1.bf16.msra.mxu0 %v1376
  %1517 = vmatprep.subr.bf16.mxu0 %v1381
  %1518 = vmatpush1.bf16.msra.mxu0 %v1380
  %1519 = vmatprep.mubr.bf16.mxu0 %v1061
  %1520 = vmatmul.mubr.bf16.gmra.mrb[0].mxu0 %v1060
  %v1521 = vpop.f32.mrb[0].mxu0
  %v1522 = vadd.f32 0.0, %v1521
  %v1523 = vpop.f32.mrb[0].mxu0
  %v1524 = vadd.f32 0.0, %v1523
  %v1525 = vpop.f32.mrb[0].mxu0
  %v1526 = vpop.f32.mrb[0].mxu0
  %1527 = vdwg.mxu0
  %v1528 = vmul.f32 %v1481, %v1481
  %v1529 = vmul.f32 %v1483, %v1483
  %v1530 = vmul.f32 %v1522, %v1522
  %v1531 = vmul.f32 %v1524, %v1524
  %v1532 = vld [vmem:[%s7] sm:$0xff]
  %v1533 = vld [vmem:[%s7 + $0x8] sm:$0xff]
  %v1534 = vld [vmem:[%s7 + $0x10] sm:$0xff]
  %v1535 = vld [vmem:[%s7 + $0x18] sm:$0xff]
  %v1536 = vld [vmem:[%s7 + $0x20] sm:$0xff]
  %v1537 = vld [vmem:[%s7 + $0x28] sm:$0xff]
  %v1538 = vld [vmem:[%s7 + $0x30] sm:$0xff]
  %v1539 = vld [vmem:[%s7 + $0x38] sm:$0xff]
  %v1540 = vld [vmem:[%s7 + $0x40] sm:$0xff]
  %v1541 = vld [vmem:[%s7 + $0x48] sm:$0xff]
  %v1542 = vld [vmem:[%s7 + $0x50] sm:$0xff]
  %v1543 = vld [vmem:[%s7 + $0x58] sm:$0xff]
  %v1544 = vld [vmem:[%s7 + $0x60] sm:$0xff]
  %v1545 = vld [vmem:[%s7 + $0x68] sm:$0xff]
  %v1546 = vld [vmem:[%s7 + $0x70] sm:$0xff]
  %v1547 = vld [vmem:[%s7 + $0x78] sm:$0xff]
  %v1548 = vld [vmem:[%s7 + $0x80] sm:$0xff]
  %v1549 = vld [vmem:[%s7 + $0x88] sm:$0xff]
  %v1550 = vld [vmem:[%s7 + $0x90] sm:$0xff]
  %v1551 = vld [vmem:[%s7 + $0x98] sm:$0xff]
  %v1552 = vld [vmem:[%s7 + $0xa0] sm:$0xff]
  %v1553 = vld [vmem:[%s7 + $0xa8] sm:$0xff]
  %v1554 = vld [vmem:[%s7 + $0xb0] sm:$0xff]
  %v1555 = vld [vmem:[%s7 + $0xb8] sm:$0xff]
  %v1556 = vld [vmem:[%s7 + $0xc0] sm:$0xff]
  %v1557 = vld [vmem:[%s7 + $0xc8] sm:$0xff]
  %v1558 = vld [vmem:[%s7 + $0xd0] sm:$0xff]
  %v1559 = vld [vmem:[%s7 + $0xd8] sm:$0xff]
  %v1560 = vld [vmem:[%s7 + $0xe0] sm:$0xff]
  %v1561 = vld [vmem:[%s7 + $0xe8] sm:$0xff]
  %v1562 = vld [vmem:[%s7 + $0xf0] sm:$0xff]
  %v1563 = vld [vmem:[%s7 + $0xf8] sm:$0xff]
  %v1564 = vld [vmem:[%s7 + $0x100] sm:$0xff]
  %v1565 = vld [vmem:[%s7 + $0x108] sm:$0xff]
  %v1566 = vld [vmem:[%s7 + $0x110] sm:$0xff]
  %v1567 = vld [vmem:[%s7 + $0x118] sm:$0xff]
  %v1568 = vld [vmem:[%s7 + $0x120] sm:$0xff]
  %v1569 = vld [vmem:[%s7 + $0x128] sm:$0xff]
  %v1570 = vld [vmem:[%s7 + $0x130] sm:$0xff]
  %v1571 = vld [vmem:[%s7 + $0x138] sm:$0xff]
  %v1572 = vld [vmem:[%s7 + $0x140] sm:$0xff]
  %v1573 = vld [vmem:[%s7 + $0x148] sm:$0xff]
  %v1574 = vld [vmem:[%s7 + $0x150] sm:$0xff]
  %v1575 = vld [vmem:[%s7 + $0x158] sm:$0xff]
  %v1576 = vld [vmem:[%s7 + $0x160] sm:$0xff]
  %v1577 = vld [vmem:[%s7 + $0x168] sm:$0xff]
  %v1578 = vld [vmem:[%s7 + $0x170] sm:$0xff]
  %v1579 = vld [vmem:[%s7 + $0x178] sm:$0xff]
  %v1580 = vld [vmem:[%s7 + $0x180] sm:$0xff]
  %v1581 = vld [vmem:[%s7 + $0x188] sm:$0xff]
  %v1582 = vld [vmem:[%s7 + $0x190] sm:$0xff]
  %v1583 = vld [vmem:[%s7 + $0x198] sm:$0xff]
  %v1584 = vld [vmem:[%s7 + $0x1a0] sm:$0xff]
  %v1585 = vld [vmem:[%s7 + $0x1a8] sm:$0xff]
  %v1586 = vld [vmem:[%s7 + $0x1b0] sm:$0xff]
  %v1587 = vld [vmem:[%s7 + $0x1b8] sm:$0xff]
  %v1588 = vld [vmem:[%s7 + $0x1c0] sm:$0xff]
  %v1589 = vld [vmem:[%s7 + $0x1c8] sm:$0xff]
  %v1590 = vld [vmem:[%s7 + $0x1d0] sm:$0xff]
  %v1591 = vld [vmem:[%s7 + $0x1d8] sm:$0xff]
  %v1592 = vld [vmem:[%s7 + $0x1e0] sm:$0xff]
  %v1593 = vld [vmem:[%s7 + $0x1e8] sm:$0xff]
  %v1594 = vld [vmem:[%s7 + $0x1f0] sm:$0xff]
  %v1595 = vld [vmem:[%s7 + $0x1f8] sm:$0xff]
  %v1596 = vld [vmem:[%s8] sm:$0x1]
  %v1598 = vlaneseq
  %v1599 = vshrl.u32 %v1598, 7
  %v1600 = vsub.s32 0, %v1599
  %v1601 = vrot.slane %v1596, %v1600
  %1603 = vmatprep.subr.mxu0 0.0
  %1604 = vmatpush1.msra.mxu0 %v1532
  %1605 = vmatprep.subr.mxu0 0.0
  %1606 = vmatpush1.msra.mxu0 %v1533
  %1607 = vmatprep.subr.mxu0 0.0
  %1608 = vmatpush1.msra.mxu0 %v1534
  %1609 = vmatprep.subr.mxu0 0.0
  %1610 = vmatpush1.msra.mxu0 %v1535
  %1611 = vmatprep.subr.mxu0 0.0
  %1612 = vmatpush1.msra.mxu0 %v1536
  %1613 = vmatprep.subr.mxu0 0.0
  %1614 = vmatpush1.msra.mxu0 %v1537
  %1615 = vmatprep.subr.mxu0 0.0
  %1616 = vmatpush1.msra.mxu0 %v1538
  %1617 = vmatprep.subr.mxu0 0.0
  %1618 = vmatpush1.msra.mxu0 %v1539
  %1619 = vmatprep.subr.mxu0 0.0
  %1620 = vmatpush1.msra.mxu0 %v1540
  %1621 = vmatprep.subr.mxu0 0.0
  %1622 = vmatpush1.msra.mxu0 %v1541
  %1623 = vmatprep.subr.mxu0 0.0
  %1624 = vmatpush1.msra.mxu0 %v1542
  %1625 = vmatprep.subr.mxu0 0.0
  %1626 = vmatpush1.msra.mxu0 %v1543
  %1627 = vmatprep.subr.mxu0 0.0
  %1628 = vmatpush1.msra.mxu0 %v1544
  %1629 = vmatprep.subr.mxu0 0.0
  %1630 = vmatpush1.msra.mxu0 %v1545
  %1631 = vmatprep.subr.mxu0 0.0
  %1632 = vmatpush1.msra.mxu0 %v1546
  %1633 = vmatprep.subr.mxu0 0.0
  %1634 = vmatpush1.msra.mxu0 %v1547
  %1635 = vmatprep.subr.mxu0 0.0
  %1636 = vmatpush1.msra.mxu0 %v1548
  %1637 = vmatprep.subr.mxu0 0.0
  %1638 = vmatpush1.msra.mxu0 %v1549
  %1639 = vmatprep.subr.mxu0 0.0
  %1640 = vmatpush1.msra.mxu0 %v1550
  %1641 = vmatprep.subr.mxu0 0.0
  %1642 = vmatpush1.msra.mxu0 %v1551
  %1643 = vmatprep.subr.mxu0 0.0
  %1644 = vmatpush1.msra.mxu0 %v1552
  %1645 = vmatprep.subr.mxu0 0.0
  %1646 = vmatpush1.msra.mxu0 %v1553
  %1647 = vmatprep.subr.mxu0 0.0
  %1648 = vmatpush1.msra.mxu0 %v1554
  %1649 = vmatprep.subr.mxu0 0.0
  %1650 = vmatpush1.msra.mxu0 %v1555
  %1651 = vmatprep.subr.mxu0 0.0
  %1652 = vmatpush1.msra.mxu0 %v1556
  %1653 = vmatprep.subr.mxu0 0.0
  %1654 = vmatpush1.msra.mxu0 %v1557
  %1655 = vmatprep.subr.mxu0 0.0
  %1656 = vmatpush1.msra.mxu0 %v1558
  %1657 = vmatprep.subr.mxu0 0.0
  %1658 = vmatpush1.msra.mxu0 %v1559
  %1659 = vmatprep.subr.mxu0 0.0
  %1660 = vmatpush1.msra.mxu0 %v1560
  %1661 = vmatprep.subr.mxu0 0.0
  %1662 = vmatpush1.msra.mxu0 %v1561
  %1663 = vmatprep.subr.mxu0 0.0
  %1664 = vmatpush1.msra.mxu0 %v1562
  %1665 = vmatprep.subr.mxu0 0.0
  %1666 = vmatpush1.msra.mxu0 %v1563
  %1667 = vmatprep.mubr.f32.mxu0 %v1529
  %1668 = vmatmul.mubr.f32.gmra.mrb[0].mxu0 %v1528
  %v1669 = vpop.f32.mrb[0].mxu0
  %v1670 = vadd.f32 %v1601, %v1669
  %v1671 = vpop.f32.mrb[0].mxu0
  %1672 = vdwg.mxu0
  %1673 = vmatprep.subr.mxu0 0.0
  %1674 = vmatpush1.msra.mxu0 %v1564
  %1675 = vmatprep.subr.mxu0 0.0
  %1676 = vmatpush1.msra.mxu0 %v1565
  %1677 = vmatprep.subr.mxu0 0.0
  %1678 = vmatpush1.msra.mxu0 %v1566
  %1679 = vmatprep.subr.mxu0 0.0
  %1680 = vmatpush1.msra.mxu0 %v1567
  %1681 = vmatprep.subr.mxu0 0.0
  %1682 = vmatpush1.msra.mxu0 %v1568
  %1683 = vmatprep.subr.mxu0 0.0
  %1684 = vmatpush1.msra.mxu0 %v1569
  %1685 = vmatprep.subr.mxu0 0.0
  %1686 = vmatpush1.msra.mxu0 %v1570
  %1687 = vmatprep.subr.mxu0 0.0
  %1688 = vmatpush1.msra.mxu0 %v1571
  %1689 = vmatprep.subr.mxu0 0.0
  %1690 = vmatpush1.msra.mxu0 %v1572
  %1691 = vmatprep.subr.mxu0 0.0
  %1692 = vmatpush1.msra.mxu0 %v1573
  %1693 = vmatprep.subr.mxu0 0.0
  %1694 = vmatpush1.msra.mxu0 %v1574
  %1695 = vmatprep.subr.mxu0 0.0
  %1696 = vmatpush1.msra.mxu0 %v1575
  %1697 = vmatprep.subr.mxu0 0.0
  %1698 = vmatpush1.msra.mxu0 %v1576
  %1699 = vmatprep.subr.mxu0 0.0
  %1700 = vmatpush1.msra.mxu0 %v1577
  %1701 = vmatprep.subr.mxu0 0.0
  %1702 = vmatpush1.msra.mxu0 %v1578
  %1703 = vmatprep.subr.mxu0 0.0
  %1704 = vmatpush1.msra.mxu0 %v1579
  %1705 = vmatprep.subr.mxu0 0.0
  %1706 = vmatpush1.msra.mxu0 %v1580
  %1707 = vmatprep.subr.mxu0 0.0
  %1708 = vmatpush1.msra.mxu0 %v1581
  %1709 = vmatprep.subr.mxu0 0.0
  %1710 = vmatpush1.msra.mxu0 %v1582
  %1711 = vmatprep.subr.mxu0 0.0
  %1712 = vmatpush1.msra.mxu0 %v1583
  %1713 = vmatprep.subr.mxu0 0.0
  %1714 = vmatpush1.msra.mxu0 %v1584
  %1715 = vmatprep.subr.mxu0 0.0
  %1716 = vmatpush1.msra.mxu0 %v1585
  %1717 = vmatprep.subr.mxu0 0.0
  %1718 = vmatpush1.msra.mxu0 %v1586
  %1719 = vmatprep.subr.mxu0 0.0
  %1720 = vmatpush1.msra.mxu0 %v1587
  %1721 = vmatprep.subr.mxu0 0.0
  %1722 = vmatpush1.msra.mxu0 %v1588
  %1723 = vmatprep.subr.mxu0 0.0
  %1724 = vmatpush1.msra.mxu0 %v1589
  %1725 = vmatprep.subr.mxu0 0.0
  %1726 = vmatpush1.msra.mxu0 %v1590
  %1727 = vmatprep.subr.mxu0 0.0
  %1728 = vmatpush1.msra.mxu0 %v1591
  %1729 = vmatprep.subr.mxu0 0.0
  %1730 = vmatpush1.msra.mxu0 %v1592
  %1731 = vmatprep.subr.mxu0 0.0
  %1732 = vmatpush1.msra.mxu0 %v1593
  %1733 = vmatprep.subr.mxu0 0.0
  %1734 = vmatpush1.msra.mxu0 %v1594
  %1735 = vmatprep.subr.mxu0 0.0
  %1736 = vmatpush1.msra.mxu0 %v1595
  %1737 = vmatprep.mubr.f32.mxu0 %v1531
  %1738 = vmatmul.mubr.f32.gmra.mrb[0].mxu0 %v1530
  %v1739 = vpop.f32.mrb[0].mxu0
  %v1740 = vadd.f32 %v1670, %v1739
  %v1741 = vpop.f32.mrb[0].mxu0
  %1742 = vdwg.mxu0
  %vm1743 = vcmask 15360
  %v1744 = vsel %vm1743, %v1740, -inf
  %1745 = vmax.xlane.f32.xlu0 %v1744
  %v1746 = vpop.xlane.xlu0 %1745
  %v1747 = vsub.f32 %v1740, %v1746
  %v1748 = vmul.f32 %v1747, 1.442695
  %v1749 = vpow.pop %v1748
  %v1750 = vsel %vm1743, %v1749, 0.0
  %1751 = vadd.xlane.f32.xlu0 %v1750
  %v1752 = vpop.xlane.xlu0 %1751
  %v1753 = vlog2.pop %v1752
  %v1754 = vmul.f32 %v1753, 0.6931472
  %v1755 = vsub.f32 %v1747, %v1754
  %1756 = vst.msk [vmem:[%s9] sm:$0xff] %vm1743, %v1755
  // Predicated region
  $region38: #{tpu_custom_call.1} parent=0 // pred_check
    _
  $region39: #{tpu_custom_call.1} parent=0 // pred_check_branch
    %1758 = sbr.rel (0) target = $region41
  $region40: #{tpu_custom_call.1} parent=0 // pred_region
    _
  $region41: #{tpu_custom_call.1} parent=0 // pred_fallthru
    _
  // Predicated region
  $region42: #{tpu_custom_call.1} parent=0 // pred_check
    _
  $region43: #{tpu_custom_call.1} parent=0 // pred_check_branch
    %1760 = sbr.rel (0) target = $region45
  $region44: #{tpu_custom_call.1} parent=0 // pred_region
    _
  $region45: #{tpu_custom_call.1} parent=0 // pred_fallthru
    _

</llo_original>
